<compile_context>
chip_gen: v7x
topology: tpu7x:2x2x1
jax: 0.10.0
libtpu: 0.0.40
codegen_flags: <defaults>
</compile_context>

<pallas_src>
import math

import jax
import jax.numpy as jnp
from jax.experimental import pallas as pl
from jax.experimental.pallas import tpu as pltpu  # noqa: F401  (TPU backend)

B, S, H = 2, 8, 32          # batch, seq, hidden
NH = 4                      # heads
DH = H // NH                # head dim
N = B * S                   # flattened rows for BN
EPS = 1e-5
SCALE = 1.0 / math.sqrt(DH)


# ---------------------------------------------------------------------------
# Single fused kernel:  out = BN(x + out_proj(MHA(x)))
# ---------------------------------------------------------------------------
def fused_kernel(x_ref, wqkv_ref, bqkv_ref, wo_ref, bo_ref,
                 gamma_ref, beta_ref, o_ref):
    # (B, S, H) -> (B*S, H): major-dim merge, no data movement.
    x2 = x_ref[...].reshape(N, H)

    # Fused QKV projection, once for the whole batch.
    qkv = jnp.dot(x2, wqkv_ref[...],
                  preferred_element_type=jnp.float32) + bqkv_ref[...]      # (N, 3H)

    # Per-head attention, batched over B (static 4-iteration head loop).
    ctx_heads = []
    for h in range(NH):
        lo = h * DH
        q_h = qkv[:, lo:lo + DH].reshape(B, S, DH)
        k_h = qkv[:, H + lo:H + lo + DH].reshape(B, S, DH)
        v_h = qkv[:, 2 * H + lo:2 * H + lo + DH].reshape(B, S, DH)

        s = jnp.einsum('bqd,bkd->bqk', q_h, k_h,
                       preferred_element_type=jnp.float32) * SCALE         # (B, S, S)
        m = jnp.max(s, axis=-1, keepdims=True)
        p = jnp.exp(s - m)
        p = p / jnp.sum(p, axis=-1, keepdims=True)
        ctx = jnp.einsum('bqk,bkd->bqd', p, v_h,
                         preferred_element_type=jnp.float32)               # (B, S, DH)
        ctx_heads.append(ctx.reshape(N, DH))

    # Concatenate heads -> single out-projection matmul + residual.
    ctx_all = jnp.concatenate(ctx_heads, axis=-1)                          # (N, H)
    y = x2 + jnp.dot(ctx_all, wo_ref[...],
                     preferred_element_type=jnp.float32) + bo_ref[...]     # (N, H)

    # BatchNorm1d with batch statistics over the N = B*S rows (biased var).
    inv_n = 1.0 / N
    mean = jnp.sum(y, axis=0, keepdims=True) * inv_n                       # (1, H)
    d = y - mean
    var = jnp.sum(d * d, axis=0, keepdims=True) * inv_n
    out = d * jax.lax.rsqrt(var + EPS) * gamma_ref[...] + beta_ref[...]

    o_ref[...] = out.reshape(B, S, H)


# ---------------------------------------------------------------------------
# Wrapper: one pallas_call, no grid — everything lives in VMEM.
# ---------------------------------------------------------------------------
def residual_block_bn(x, wqkv, bqkv, wo, bo, gamma, beta):
    return pl.pallas_call(
        fused_kernel,
        out_shape=jax.ShapeDtypeStruct((B, S, H), jnp.float32),
    )(x, wqkv, bqkv, wo, bo, gamma, beta)


# ---------------------------------------------------------------------------
# Pure-JAX reference for verification
# ---------------------------------------------------------------------------
def reference(x, wqkv, bqkv, wo, bo, gamma, beta):
    qkv = x @ wqkv + bqkv                                        # (B, S, 3H)
    q, k, v = jnp.split(qkv, 3, axis=-1)
    q = q.reshape(B, S, NH, DH).transpose(0, 2, 1, 3)
    k = k.reshape(B, S, NH, DH).transpose(0, 2, 1, 3)
    v = v.reshape(B, S, NH, DH).transpose(0, 2, 1, 3)
    s = jnp.einsum('bhqd,bhkd->bhqk', q, k) * SCALE
    p = jax.nn.softmax(s, axis=-1)
    ctx = jnp.einsum('bhqk,bhkd->bhqd', p, v).transpose(0, 2, 1, 3).reshape(B, S, H)
    y = x + ctx @ wo + bo
    y2 = y.reshape(N, H)
    mean = y2.mean(0, keepdims=True)
    var = ((y2 - mean) ** 2).mean(0, keepdims=True)
    out = (y2 - mean) * jax.lax.rsqrt(var + EPS) * gamma + beta
    return out.reshape(B, S, H)


if __name__ == "__main__":
    key = jax.random.PRNGKey(0)
    ks = jax.random.split(key, 7)
    x = jax.random.normal(ks[0], (B, S, H), jnp.float32)
    wqkv = jax.random.normal(ks[1], (H, 3 * H), jnp.float32) / math.sqrt(H)
    bqkv = jax.random.normal(ks[2], (1, 3 * H), jnp.float32) * 0.01
    wo = jax.random.normal(ks[3], (H, H), jnp.float32) / math.sqrt(H)
    bo = jax.random.normal(ks[4], (1, H), jnp.float32) * 0.01
    gamma = 1.0 + 0.1 * jax.random.normal(ks[5], (1, H), jnp.float32)
    beta = 0.1 * jax.random.normal(ks[6], (1, H), jnp.float32)

    out = residual_block_bn(x, wqkv, bqkv, wo, bo, gamma, beta)
    jax.block_until_ready(out)

    ref = reference(x, wqkv, bqkv, wo, bo, gamma, beta)
    assert out.shape == (B, S, H)
    assert jnp.allclose(out, ref, atol=1e-4, rtol=1e-4), "mismatch vs reference"
    print("KERNEL_OK")
</pallas_src>

<mosaic_0001>
module attributes {stable_mosaic.version = 11 : i64} {
  func.func @fused_kernel(%arg0: memref<2x8x32xf32, #tpu.memory_space<vmem>>, %arg1: memref<32x96xf32, #tpu.memory_space<vmem>>, %arg2: memref<1x96xf32, #tpu.memory_space<vmem>>, %arg3: memref<32x32xf32, #tpu.memory_space<vmem>>, %arg4: memref<1x32xf32, #tpu.memory_space<vmem>>, %arg5: memref<1x32xf32, #tpu.memory_space<vmem>>, %arg6: memref<1x32xf32, #tpu.memory_space<vmem>>, %arg7: memref<2x8x32xf32, #tpu.memory_space<vmem>>) attributes {dimension_semantics = [], scalar_prefetch = 0 : i64, scratch_operands = 0 : i64, tpu.core_type = #tpu.core_type<tc>} {
    %c0 = arith.constant 0 : index
    %c0_0 = arith.constant 0 : index
    %c0_1 = arith.constant 0 : index
    %0 = vector.load %arg0[%c0, %c0_0, %c0_1] : memref<2x8x32xf32, #tpu.memory_space<vmem>>, vector<2x8x32xf32>
    %1 = vector.shape_cast %0 : vector<2x8x32xf32> to vector<16x32xf32>
    %c0_2 = arith.constant 0 : index
    %c0_3 = arith.constant 0 : index
    %2 = vector.load %arg1[%c0_2, %c0_3] : memref<32x96xf32, #tpu.memory_space<vmem>>, vector<32x96xf32>
    %cst = arith.constant dense<0.000000e+00> : vector<16x96xf32>
    %3 = tpu.matmul %1, %2, %cst {dimension_numbers = #tpu.dot_dimension_numbers<[1], [0], [0], [1], [0, 0, 1, 1], [], []>} : vector<16x32xf32>, vector<32x96xf32>, vector<16x96xf32> -> vector<16x96xf32>
    %c0_4 = arith.constant 0 : index
    %c0_5 = arith.constant 0 : index
    %4 = vector.load %arg2[%c0_4, %c0_5] : memref<1x96xf32, #tpu.memory_space<vmem>>, vector<1x96xf32>
    %5 = vector.broadcast %4 : vector<1x96xf32> to vector<16x96xf32>
    %6 = arith.addf %3, %5 : vector<16x96xf32>
    %7 = vector.extract_strided_slice %6 {offsets = [0, 0], sizes = [16, 8], strides = [1, 1]} : vector<16x96xf32> to vector<16x8xf32>
    %8 = vector.shape_cast %7 : vector<16x8xf32> to vector<2x8x8xf32>
    %9 = vector.extract_strided_slice %6 {offsets = [0, 32], sizes = [16, 8], strides = [1, 1]} : vector<16x96xf32> to vector<16x8xf32>
    %10 = vector.shape_cast %9 : vector<16x8xf32> to vector<2x8x8xf32>
    %11 = vector.extract_strided_slice %6 {offsets = [0, 64], sizes = [16, 8], strides = [1, 1]} : vector<16x96xf32> to vector<16x8xf32>
    %12 = vector.shape_cast %11 : vector<16x8xf32> to vector<2x8x8xf32>
    "tpu.trace_start"() <{level = 10 : i32, message = "bqd,bkd->bqk"}> : () -> ()
    %cst_6 = arith.constant dense<0.000000e+00> : vector<2x8x8xf32>
    %13 = tpu.matmul %8, %10, %cst_6 {dimension_numbers = #tpu.dot_dimension_numbers<[2], [2], [1], [1], [0, 0, 0, 1, 1, 1], [0], [0]>} : vector<2x8x8xf32>, vector<2x8x8xf32>, vector<2x8x8xf32> -> vector<2x8x8xf32>
    "tpu.trace_stop"() : () -> ()
    %cst_7 = arith.constant 0.353553385 : f32
    %14 = vector.broadcast %cst_7 : f32 to vector<2x8x8xf32>
    %15 = arith.mulf %13, %14 : vector<2x8x8xf32>
    %cst_8 = arith.constant dense<0xFF800000> : vector<2x8xf32>
    %16 = vector.multi_reduction <maximumf>, %15, %cst_8 [2] : vector<2x8x8xf32> to vector<2x8xf32>
    %17 = vector.shape_cast %16 : vector<2x8xf32> to vector<2x8x1xf32>
    %18 = vector.broadcast %17 : vector<2x8x1xf32> to vector<2x8x8xf32>
    %19 = arith.subf %15, %18 : vector<2x8x8xf32>
    %20 = math.exp %19 : vector<2x8x8xf32>
    %cst_9 = arith.constant dense<0.000000e+00> : vector<2x8xf32>
    %21 = vector.multi_reduction <add>, %20, %cst_9 [2] : vector<2x8x8xf32> to vector<2x8xf32>
    %22 = vector.shape_cast %21 : vector<2x8xf32> to vector<2x8x1xf32>
    %23 = vector.broadcast %22 : vector<2x8x1xf32> to vector<2x8x8xf32>
    %24 = arith.divf %20, %23 : vector<2x8x8xf32>
    "tpu.trace_start"() <{level = 10 : i32, message = "bqk,bkd->bqd"}> : () -> ()
    %cst_10 = arith.constant dense<0.000000e+00> : vector<2x8x8xf32>
    %25 = tpu.matmul %24, %12, %cst_10 {dimension_numbers = #tpu.dot_dimension_numbers<[2], [1], [1], [2], [0, 0, 0, 1, 1, 2], [0], [0]>} : vector<2x8x8xf32>, vector<2x8x8xf32>, vector<2x8x8xf32> -> vector<2x8x8xf32>
    "tpu.trace_stop"() : () -> ()
    %26 = vector.shape_cast %25 : vector<2x8x8xf32> to vector<16x8xf32>
    %27 = vector.extract_strided_slice %6 {offsets = [0, 8], sizes = [16, 8], strides = [1, 1]} : vector<16x96xf32> to vector<16x8xf32>
    %28 = vector.shape_cast %27 : vector<16x8xf32> to vector<2x8x8xf32>
    %29 = vector.extract_strided_slice %6 {offsets = [0, 40], sizes = [16, 8], strides = [1, 1]} : vector<16x96xf32> to vector<16x8xf32>
    %30 = vector.shape_cast %29 : vector<16x8xf32> to vector<2x8x8xf32>
    %31 = vector.extract_strided_slice %6 {offsets = [0, 72], sizes = [16, 8], strides = [1, 1]} : vector<16x96xf32> to vector<16x8xf32>
    %32 = vector.shape_cast %31 : vector<16x8xf32> to vector<2x8x8xf32>
    "tpu.trace_start"() <{level = 10 : i32, message = "bqd,bkd->bqk"}> : () -> ()
    %cst_11 = arith.constant dense<0.000000e+00> : vector<2x8x8xf32>
    %33 = tpu.matmul %28, %30, %cst_11 {dimension_numbers = #tpu.dot_dimension_numbers<[2], [2], [1], [1], [0, 0, 0, 1, 1, 1], [0], [0]>} : vector<2x8x8xf32>, vector<2x8x8xf32>, vector<2x8x8xf32> -> vector<2x8x8xf32>
    "tpu.trace_stop"() : () -> ()
    %cst_12 = arith.constant 0.353553385 : f32
    %34 = vector.broadcast %cst_12 : f32 to vector<2x8x8xf32>
    %35 = arith.mulf %33, %34 : vector<2x8x8xf32>
    %cst_13 = arith.constant dense<0xFF800000> : vector<2x8xf32>
    %36 = vector.multi_reduction <maximumf>, %35, %cst_13 [2] : vector<2x8x8xf32> to vector<2x8xf32>
    %37 = vector.shape_cast %36 : vector<2x8xf32> to vector<2x8x1xf32>
    %38 = vector.broadcast %37 : vector<2x8x1xf32> to vector<2x8x8xf32>
    %39 = arith.subf %35, %38 : vector<2x8x8xf32>
    %40 = math.exp %39 : vector<2x8x8xf32>
    %cst_14 = arith.constant dense<0.000000e+00> : vector<2x8xf32>
    %41 = vector.multi_reduction <add>, %40, %cst_14 [2] : vector<2x8x8xf32> to vector<2x8xf32>
    %42 = vector.shape_cast %41 : vector<2x8xf32> to vector<2x8x1xf32>
    %43 = vector.broadcast %42 : vector<2x8x1xf32> to vector<2x8x8xf32>
    %44 = arith.divf %40, %43 : vector<2x8x8xf32>
    "tpu.trace_start"() <{level = 10 : i32, message = "bqk,bkd->bqd"}> : () -> ()
    %cst_15 = arith.constant dense<0.000000e+00> : vector<2x8x8xf32>
    %45 = tpu.matmul %44, %32, %cst_15 {dimension_numbers = #tpu.dot_dimension_numbers<[2], [1], [1], [2], [0, 0, 0, 1, 1, 2], [0], [0]>} : vector<2x8x8xf32>, vector<2x8x8xf32>, vector<2x8x8xf32> -> vector<2x8x8xf32>
    "tpu.trace_stop"() : () -> ()
    %46 = vector.shape_cast %45 : vector<2x8x8xf32> to vector<16x8xf32>
    %47 = vector.extract_strided_slice %6 {offsets = [0, 16], sizes = [16, 8], strides = [1, 1]} : vector<16x96xf32> to vector<16x8xf32>
    %48 = vector.shape_cast %47 : vector<16x8xf32> to vector<2x8x8xf32>
    %49 = vector.extract_strided_slice %6 {offsets = [0, 48], sizes = [16, 8], strides = [1, 1]} : vector<16x96xf32> to vector<16x8xf32>
    %50 = vector.shape_cast %49 : vector<16x8xf32> to vector<2x8x8xf32>
    %51 = vector.extract_strided_slice %6 {offsets = [0, 80], sizes = [16, 8], strides = [1, 1]} : vector<16x96xf32> to vector<16x8xf32>
    %52 = vector.shape_cast %51 : vector<16x8xf32> to vector<2x8x8xf32>
    "tpu.trace_start"() <{level = 10 : i32, message = "bqd,bkd->bqk"}> : () -> ()
    %cst_16 = arith.constant dense<0.000000e+00> : vector<2x8x8xf32>
    %53 = tpu.matmul %48, %50, %cst_16 {dimension_numbers = #tpu.dot_dimension_numbers<[2], [2], [1], [1], [0, 0, 0, 1, 1, 1], [0], [0]>} : vector<2x8x8xf32>, vector<2x8x8xf32>, vector<2x8x8xf32> -> vector<2x8x8xf32>
    "tpu.trace_stop"() : () -> ()
    %cst_17 = arith.constant 0.353553385 : f32
    %54 = vector.broadcast %cst_17 : f32 to vector<2x8x8xf32>
    %55 = arith.mulf %53, %54 : vector<2x8x8xf32>
    %cst_18 = arith.constant dense<0xFF800000> : vector<2x8xf32>
    %56 = vector.multi_reduction <maximumf>, %55, %cst_18 [2] : vector<2x8x8xf32> to vector<2x8xf32>
    %57 = vector.shape_cast %56 : vector<2x8xf32> to vector<2x8x1xf32>
    %58 = vector.broadcast %57 : vector<2x8x1xf32> to vector<2x8x8xf32>
    %59 = arith.subf %55, %58 : vector<2x8x8xf32>
    %60 = math.exp %59 : vector<2x8x8xf32>
    %cst_19 = arith.constant dense<0.000000e+00> : vector<2x8xf32>
    %61 = vector.multi_reduction <add>, %60, %cst_19 [2] : vector<2x8x8xf32> to vector<2x8xf32>
    %62 = vector.shape_cast %61 : vector<2x8xf32> to vector<2x8x1xf32>
    %63 = vector.broadcast %62 : vector<2x8x1xf32> to vector<2x8x8xf32>
    %64 = arith.divf %60, %63 : vector<2x8x8xf32>
    "tpu.trace_start"() <{level = 10 : i32, message = "bqk,bkd->bqd"}> : () -> ()
    %cst_20 = arith.constant dense<0.000000e+00> : vector<2x8x8xf32>
    %65 = tpu.matmul %64, %52, %cst_20 {dimension_numbers = #tpu.dot_dimension_numbers<[2], [1], [1], [2], [0, 0, 0, 1, 1, 2], [0], [0]>} : vector<2x8x8xf32>, vector<2x8x8xf32>, vector<2x8x8xf32> -> vector<2x8x8xf32>
    "tpu.trace_stop"() : () -> ()
    %66 = vector.shape_cast %65 : vector<2x8x8xf32> to vector<16x8xf32>
    %67 = vector.extract_strided_slice %6 {offsets = [0, 24], sizes = [16, 8], strides = [1, 1]} : vector<16x96xf32> to vector<16x8xf32>
    %68 = vector.shape_cast %67 : vector<16x8xf32> to vector<2x8x8xf32>
    %69 = vector.extract_strided_slice %6 {offsets = [0, 56], sizes = [16, 8], strides = [1, 1]} : vector<16x96xf32> to vector<16x8xf32>
    %70 = vector.shape_cast %69 : vector<16x8xf32> to vector<2x8x8xf32>
    %71 = vector.extract_strided_slice %6 {offsets = [0, 88], sizes = [16, 8], strides = [1, 1]} : vector<16x96xf32> to vector<16x8xf32>
    %72 = vector.shape_cast %71 : vector<16x8xf32> to vector<2x8x8xf32>
    "tpu.trace_start"() <{level = 10 : i32, message = "bqd,bkd->bqk"}> : () -> ()
    %cst_21 = arith.constant dense<0.000000e+00> : vector<2x8x8xf32>
    %73 = tpu.matmul %68, %70, %cst_21 {dimension_numbers = #tpu.dot_dimension_numbers<[2], [2], [1], [1], [0, 0, 0, 1, 1, 1], [0], [0]>} : vector<2x8x8xf32>, vector<2x8x8xf32>, vector<2x8x8xf32> -> vector<2x8x8xf32>
    "tpu.trace_stop"() : () -> ()
    %cst_22 = arith.constant 0.353553385 : f32
    %74 = vector.broadcast %cst_22 : f32 to vector<2x8x8xf32>
    %75 = arith.mulf %73, %74 : vector<2x8x8xf32>
    %cst_23 = arith.constant dense<0xFF800000> : vector<2x8xf32>
    %76 = vector.multi_reduction <maximumf>, %75, %cst_23 [2] : vector<2x8x8xf32> to vector<2x8xf32>
    %77 = vector.shape_cast %76 : vector<2x8xf32> to vector<2x8x1xf32>
    %78 = vector.broadcast %77 : vector<2x8x1xf32> to vector<2x8x8xf32>
    %79 = arith.subf %75, %78 : vector<2x8x8xf32>
    %80 = math.exp %79 : vector<2x8x8xf32>
    %cst_24 = arith.constant dense<0.000000e+00> : vector<2x8xf32>
    %81 = vector.multi_reduction <add>, %80, %cst_24 [2] : vector<2x8x8xf32> to vector<2x8xf32>
    %82 = vector.shape_cast %81 : vector<2x8xf32> to vector<2x8x1xf32>
    %83 = vector.broadcast %82 : vector<2x8x1xf32> to vector<2x8x8xf32>
    %84 = arith.divf %80, %83 : vector<2x8x8xf32>
    "tpu.trace_start"() <{level = 10 : i32, message = "bqk,bkd->bqd"}> : () -> ()
    %cst_25 = arith.constant dense<0.000000e+00> : vector<2x8x8xf32>
    %85 = tpu.matmul %84, %72, %cst_25 {dimension_numbers = #tpu.dot_dimension_numbers<[2], [1], [1], [2], [0, 0, 0, 1, 1, 2], [0], [0]>} : vector<2x8x8xf32>, vector<2x8x8xf32>, vector<2x8x8xf32> -> vector<2x8x8xf32>
    "tpu.trace_stop"() : () -> ()
    %86 = vector.shape_cast %85 : vector<2x8x8xf32> to vector<16x8xf32>
    %87 = tpu.concatenate %26, %46, %66, %86 in 1 : vector<16x8xf32>, vector<16x8xf32>, vector<16x8xf32>, vector<16x8xf32> -> vector<16x32xf32>
    %c0_26 = arith.constant 0 : index
    %c0_27 = arith.constant 0 : index
    %88 = vector.load %arg3[%c0_26, %c0_27] : memref<32x32xf32, #tpu.memory_space<vmem>>, vector<32x32xf32>
    %cst_28 = arith.constant dense<0.000000e+00> : vector<16x32xf32>
    %89 = tpu.matmul %87, %88, %cst_28 {dimension_numbers = #tpu.dot_dimension_numbers<[1], [0], [0], [1], [0, 0, 1, 1], [], []>} : vector<16x32xf32>, vector<32x32xf32>, vector<16x32xf32> -> vector<16x32xf32>
    %90 = arith.addf %1, %89 : vector<16x32xf32>
    %c0_29 = arith.constant 0 : index
    %c0_30 = arith.constant 0 : index
    %91 = vector.load %arg4[%c0_29, %c0_30] : memref<1x32xf32, #tpu.memory_space<vmem>>, vector<1x32xf32>
    %92 = vector.broadcast %91 : vector<1x32xf32> to vector<16x32xf32>
    %93 = arith.addf %90, %92 : vector<16x32xf32>
    %cst_31 = arith.constant dense<0.000000e+00> : vector<32xf32>
    %94 = vector.multi_reduction <add>, %93, %cst_31 [0] : vector<16x32xf32> to vector<32xf32>
    %95 = vector.shape_cast %94 : vector<32xf32> to vector<1x32xf32>
    %cst_32 = arith.constant 6.250000e-02 : f32
    %96 = vector.broadcast %cst_32 : f32 to vector<1x32xf32>
    %97 = arith.mulf %95, %96 : vector<1x32xf32>
    %98 = vector.broadcast %97 : vector<1x32xf32> to vector<16x32xf32>
    %99 = arith.subf %93, %98 : vector<16x32xf32>
    %100 = arith.mulf %99, %99 : vector<16x32xf32>
    %cst_33 = arith.constant dense<0.000000e+00> : vector<32xf32>
    %101 = vector.multi_reduction <add>, %100, %cst_33 [0] : vector<16x32xf32> to vector<32xf32>
    %102 = vector.shape_cast %101 : vector<32xf32> to vector<1x32xf32>
    %cst_34 = arith.constant 6.250000e-02 : f32
    %103 = vector.broadcast %cst_34 : f32 to vector<1x32xf32>
    %104 = arith.mulf %102, %103 : vector<1x32xf32>
    %cst_35 = arith.constant 9.99999974E-6 : f32
    %105 = vector.broadcast %cst_35 : f32 to vector<1x32xf32>
    %106 = arith.addf %104, %105 : vector<1x32xf32>
    %107 = math.rsqrt %106 : vector<1x32xf32>
    %108 = vector.broadcast %107 : vector<1x32xf32> to vector<16x32xf32>
    %109 = arith.mulf %99, %108 : vector<16x32xf32>
    %c0_36 = arith.constant 0 : index
    %c0_37 = arith.constant 0 : index
    %110 = vector.load %arg5[%c0_36, %c0_37] : memref<1x32xf32, #tpu.memory_space<vmem>>, vector<1x32xf32>
    %111 = vector.broadcast %110 : vector<1x32xf32> to vector<16x32xf32>
    %112 = arith.mulf %109, %111 : vector<16x32xf32>
    %c0_38 = arith.constant 0 : index
    %c0_39 = arith.constant 0 : index
    %113 = vector.load %arg6[%c0_38, %c0_39] : memref<1x32xf32, #tpu.memory_space<vmem>>, vector<1x32xf32>
    %114 = vector.broadcast %113 : vector<1x32xf32> to vector<16x32xf32>
    %115 = arith.addf %112, %114 : vector<16x32xf32>
    %116 = vector.shape_cast %115 : vector<16x32xf32> to vector<2x8x32xf32>
    %c0_40 = arith.constant 0 : index
    %c0_41 = arith.constant 0 : index
    %c0_42 = arith.constant 0 : index
    %117 = vector.load %arg7[%c0_40, %c0_41, %c0_42] : memref<2x8x32xf32, #tpu.memory_space<vmem>>, vector<2x8x32xf32>
    tpu.vector_store %arg7[%c0_40, %c0_41, %c0_42], %116 {strides = array<i32>} : memref<2x8x32xf32, #tpu.memory_space<vmem>>, vector<2x8x32xf32>,
    return
  }
}

</mosaic_0001>

<llo_original>
// kernel: tpu_custom_call.1
$region0: #{tpu_custom_call.1}
  #allocation0 [shape = 'u32[]', space=smem, size = 0x4, offset = 0x4, fixed_abs, tag = 'smem constant byte address 0x4 - core index']
  #allocation1 [shape = 'u32[144,128]{1,0:T(1,128)}', space=vmem, size = 0x12000, scoped, tag = 'internal scratch']
  %s0 = inlined_call_operand.hbm [shape: f32[2,8,32], index: 0, kind: input, shape index: {}]
  %s1 = inlined_call_operand.hbm [shape: f32[32,96], index: 1, kind: input, shape index: {}]
  %s2 = inlined_call_operand.vmem [shape: f32[1,96], index: 2, kind: input, shape index: {}]
  %s3 = inlined_call_operand.hbm [shape: f32[32,32], index: 3, kind: input, shape index: {}]
  %s4 = inlined_call_operand.vmem [shape: f32[1,32], index: 4, kind: input, shape index: {}]
  %s5 = inlined_call_operand.vmem [shape: f32[1,32], index: 5, kind: input, shape index: {}]
  %s6 = inlined_call_operand.vmem [shape: f32[1,32], index: 6, kind: input, shape index: {}]
  %s7 = inlined_call_operand.hbm [shape: f32[2,8,32], index: 7, kind: output, shape index: {}]
  %s8 = sld [smem:[#allocation0]]
  $region50: #{tpu_custom_call.1} parent=0
    _
  %s10 = ssub.s32 1, %s8
  %s11 = scalar_select 0, %s10, %s8
  $region1: #{tpu_custom_call.1} parent=0
    #allocation2 [shape = 'u8[8192]{0}', space=vmem, size = 0x2000, scoped, tag = 'input window, operand 0, single buffered']
    #allocation3 [shape = 's32[1]{0}', space=sflag, size = 0x4, scoped, tag = 'scoped memory for tpu_custom_call.1']
    #allocation4 [shape = 's32[1]{0}', space=sflag, size = 0x4, scoped, tag = 'scoped memory for tpu_custom_call.1']
    #allocation5 [shape = 'u8[16384]{0}', space=vmem, size = 0x4000, scoped, tag = 'input window, operand 1, single buffered']
    #allocation6 [shape = 's32[1]{0}', space=sflag, size = 0x4, scoped, tag = 'scoped memory for tpu_custom_call.1']
    #allocation7 [shape = 'u8[16384]{0}', space=vmem, size = 0x4000, scoped, tag = 'input window, operand 3, single buffered']
    #allocation8 [shape = 'u8[8192]{0}', space=vmem, size = 0x2000, scoped, tag = 'output window, operand 0, single buffered']
    %12 = vsyncpa [#allocation3], 0
    %13 = vsyncpa [#allocation6], 0
    %14 = vsyncpa [#allocation4], 0
    // Predicated region
    $region2: #{tpu_custom_call.1} parent=1 // pred_check
      _
    $region3: #{tpu_custom_call.1} parent=1 // pred_check_branch
      %16 = sbr.rel (0) target = $region5
    $region4: #{tpu_custom_call.1} parent=1 // pred_region
      %s18 = ssub.s32 256, 256
      %19 = vsyncadd [#allocation3], %s18
      %s20 = sshll.u32 [#allocation2], 4
      %s21 = int_to_ptr.vmem [resolvable:$true] %s20
      %26 = dma.hbm_to_vmem [thread:$0]  %s0, 256, %s21, [#allocation3], 128, 128, 8
    $region5: #{tpu_custom_call.1} parent=1 // pred_fallthru
      _
    // Predicated region
    $region6: #{tpu_custom_call.1} parent=1 // pred_check
      _
    $region7: #{tpu_custom_call.1} parent=1 // pred_check_branch
      %28 = sbr.rel (0) target = $region9
    $region8: #{tpu_custom_call.1} parent=1 // pred_region
      %s30 = ssub.s32 512, 512
      %31 = vsyncadd [#allocation6], %s30
      %s32 = sshll.u32 [#allocation5], 4
      %s33 = int_to_ptr.vmem [resolvable:$true] %s32
      %38 = dma.hbm_to_vmem [thread:$0]  %s1, 512, %s33, [#allocation6], 128, 128, 8
    $region9: #{tpu_custom_call.1} parent=1 // pred_fallthru
      _
    // Predicated region
    $region10: #{tpu_custom_call.1} parent=1 // pred_check
      _
    $region11: #{tpu_custom_call.1} parent=1 // pred_check_branch
      %40 = sbr.rel (0) target = $region13
    $region12: #{tpu_custom_call.1} parent=1 // pred_region
      _
    $region13: #{tpu_custom_call.1} parent=1 // pred_fallthru
      _
    // Predicated region
    $region14: #{tpu_custom_call.1} parent=1 // pred_check
      _
    $region15: #{tpu_custom_call.1} parent=1 // pred_check_branch
      %42 = sbr.rel (0) target = $region17
    $region16: #{tpu_custom_call.1} parent=1 // pred_region
      %s44 = ssub.s32 512, 512
      %45 = vsyncadd [#allocation6], %s44
      %s46 = sshll.u32 [#allocation7], 4
      %s47 = int_to_ptr.vmem [resolvable:$true] %s46
      %52 = dma.hbm_to_vmem [thread:$0]  %s3, 512, %s47, [#allocation6], 128, 128, 8
    $region17: #{tpu_custom_call.1} parent=1 // pred_fallthru
      _
    // Predicated region
    $region18: #{tpu_custom_call.1} parent=1 // pred_check
      _
    $region19: #{tpu_custom_call.1} parent=1 // pred_check_branch
      %54 = sbr.rel (0) target = $region21
    $region20: #{tpu_custom_call.1} parent=1 // pred_region
      _
    $region21: #{tpu_custom_call.1} parent=1 // pred_fallthru
      _
    // Predicated region
    $region22: #{tpu_custom_call.1} parent=1 // pred_check
      _
    $region23: #{tpu_custom_call.1} parent=1 // pred_check_branch
      %56 = sbr.rel (0) target = $region25
    $region24: #{tpu_custom_call.1} parent=1 // pred_region
      _
    $region25: #{tpu_custom_call.1} parent=1 // pred_fallthru
      _
    // Predicated region
    $region26: #{tpu_custom_call.1} parent=1 // pred_check
      _
    $region27: #{tpu_custom_call.1} parent=1 // pred_check_branch
      %58 = sbr.rel (0) target = $region29
    $region28: #{tpu_custom_call.1} parent=1 // pred_region
      _
    $region29: #{tpu_custom_call.1} parent=1 // pred_fallthru
      _
    // Predicated region
    $region30: #{tpu_custom_call.1} parent=1 // pred_check
      _
    $region31: #{tpu_custom_call.1} parent=1 // pred_check_branch
      %60 = sbr.rel (0) target = $region33
    $region32: #{tpu_custom_call.1} parent=1 // pred_region
      %61 = dma.done [#allocation3], 256
    $region33: #{tpu_custom_call.1} parent=1 // pred_fallthru
      _
    // Predicated region
    $region34: #{tpu_custom_call.1} parent=1 // pred_check
      _
    $region35: #{tpu_custom_call.1} parent=1 // pred_check_branch
      %63 = sbr.rel (0) target = $region37
    $region36: #{tpu_custom_call.1} parent=1 // pred_region
      %64 = dma.done [#allocation6], 512
    $region37: #{tpu_custom_call.1} parent=1 // pred_fallthru
      _
    // Predicated region
    $region38: #{tpu_custom_call.1} parent=1 // pred_check
      _
    $region39: #{tpu_custom_call.1} parent=1 // pred_check_branch
      %66 = sbr.rel (0) target = $region41
    $region40: #{tpu_custom_call.1} parent=1 // pred_region
      %67 = dma.done [#allocation6], 512
    $region41: #{tpu_custom_call.1} parent=1 // pred_fallthru
      _
    %v68 = vld [vmem:[#allocation2] sm:$0xff]
    %v69 = vld [vmem:[#allocation2 + $0x8] sm:$0xff]
    %v70 = vld [vmem:[#allocation5] sm:$0xff]
    %v71 = vld [vmem:[#allocation5 + $0x8] sm:$0xff]
    %v72 = vld [vmem:[#allocation5 + $0x10] sm:$0xff]
    %v73 = vld [vmem:[#allocation5 + $0x18] sm:$0xff]
    %v74 = vld [vmem:[%s2] sm:$0x1]
    %v76 = vlaneseq
    %v77 = vshrl.u32 %v76, 7
    %v78 = vsub.s32 0, %v77
    %v79 = vrot.slane %v74, %v78
    %vm81 = vcmask 261120
    %v83 = vsel %vm81, %v68, 0
    %v86 = vsel %vm81, %v69, 0
    %88 = vmatprep.subr.mxu0 0.0
    %89 = vmatpush1.msra.mxu0 %v70
    %90 = vmatprep.subr.mxu0 0.0
    %91 = vmatpush1.msra.mxu0 %v71
    %92 = vmatprep.subr.mxu0 0.0
    %93 = vmatpush1.msra.mxu0 %v72
    %94 = vmatprep.subr.mxu0 0.0
    %95 = vmatpush1.msra.mxu0 %v73
    %96 = vmatprep.subr.mxu0 0.0
    %97 = vmatpush1.msra.mxu0 0.0
    %98 = vmatprep.subr.mxu0 0.0
    %99 = vmatpush1.msra.mxu0 0.0
    %100 = vmatprep.subr.mxu0 0.0
    %101 = vmatpush1.msra.mxu0 0.0
    %102 = vmatprep.subr.mxu0 0.0
    %103 = vmatpush1.msra.mxu0 0.0
    %104 = vmatprep.subr.mxu0 0.0
    %105 = vmatpush1.msra.mxu0 0.0
    %106 = vmatprep.subr.mxu0 0.0
    %107 = vmatpush1.msra.mxu0 0.0
    %108 = vmatprep.subr.mxu0 0.0
    %109 = vmatpush1.msra.mxu0 0.0
    %110 = vmatprep.subr.mxu0 0.0
    %111 = vmatpush1.msra.mxu0 0.0
    %112 = vmatprep.subr.mxu0 0.0
    %113 = vmatpush1.msra.mxu0 0.0
    %114 = vmatprep.subr.mxu0 0.0
    %115 = vmatpush1.msra.mxu0 0.0
    %116 = vmatprep.subr.mxu0 0.0
    %117 = vmatpush1.msra.mxu0 0.0
    %118 = vmatprep.subr.mxu0 0.0
    %119 = vmatpush1.msra.mxu0 0.0
    %120 = vmatprep.subr.mxu0 0.0
    %121 = vmatpush1.msra.mxu0 0.0
    %122 = vmatprep.subr.mxu0 0.0
    %123 = vmatpush1.msra.mxu0 0.0
    %124 = vmatprep.subr.mxu0 0.0
    %125 = vmatpush1.msra.mxu0 0.0
    %126 = vmatprep.subr.mxu0 0.0
    %127 = vmatpush1.msra.mxu0 0.0
    %128 = vmatprep.subr.mxu0 0.0
    %129 = vmatpush1.msra.mxu0 0.0
    %130 = vmatprep.subr.mxu0 0.0
    %131 = vmatpush1.msra.mxu0 0.0
    %132 = vmatprep.subr.mxu0 0.0
    %133 = vmatpush1.msra.mxu0 0.0
    %134 = vmatprep.subr.mxu0 0.0
    %135 = vmatpush1.msra.mxu0 0.0
    %136 = vmatprep.subr.mxu0 0.0
    %137 = vmatpush1.msra.mxu0 0.0
    %138 = vmatprep.subr.mxu0 0.0
    %139 = vmatpush1.msra.mxu0 0.0
    %140 = vmatprep.subr.mxu0 0.0
    %141 = vmatpush1.msra.mxu0 0.0
    %142 = vmatprep.subr.mxu0 0.0
    %143 = vmatpush1.msra.mxu0 0.0
    %144 = vmatprep.subr.mxu0 0.0
    %145 = vmatpush1.msra.mxu0 0.0
    %146 = vmatprep.subr.mxu0 0.0
    %147 = vmatpush1.msra.mxu0 0.0
    %148 = vmatprep.subr.mxu0 0.0
    %149 = vmatpush1.msra.mxu0 0.0
    %150 = vmatprep.subr.mxu0 0.0
    %151 = vmatpush1.msra.mxu0 0.0
    %152 = vmatprep.mubr.f32.mxu0 0.0
    %153 = vmatmul.mubr.f32.gmra.mrb[0].mxu0 %v83
    %v154 = vpop.f32.mrb[0].mxu0
    %v155 = vadd.f32 %v79, %v154
    %v156 = vpop.f32.mrb[0].mxu0
    %157 = vmatprep.mubr.f32.mxu0 0.0
    %158 = vmatmul.mubr.f32.gmra.mrb[0].mxu0 %v86
    %v159 = vpop.f32.mrb[0].mxu0
    %v160 = vadd.f32 %v79, %v159
    %v161 = vpop.f32.mrb[0].mxu0
    %162 = vdwg.mxu0
    %164 = vrot.lane.b32.xlu0 %v155, 96
    %v165 = vpop.permute.xlu0 %164
    %vm166 = vcmask 64512
    %v167 = vsel %vm166, %v155, 0
    %v169 = vsel %vm166, %v165, 0
    %171 = vmatprep.subr.mxu0 0.0
    %172 = vmatpush1.xpose.msra.mxu0 %v169
    %173 = vmatprep.subr.mxu0 0.0
    %174 = vmatpush1.xpose.msra.mxu0 0.0
    %175 = vmatprep.subr.mxu0 0.0
    %176 = vmatpush1.xpose.msra.mxu0 0.0
    %177 = vmatprep.subr.mxu0 0.0
    %178 = vmatpush1.xpose.msra.mxu0 0.0
    %179 = vmatprep.subr.mxu0 0.0
    %180 = vmatpush1.xpose.msra.mxu0 0.0
    %181 = vmatprep.subr.mxu0 0.0
    %182 = vmatpush1.xpose.msra.mxu0 0.0
    %183 = vmatprep.subr.mxu0 0.0
    %184 = vmatpush1.xpose.msra.mxu0 0.0
    %185 = vmatprep.subr.mxu0 0.0
    %186 = vmatpush1.xpose.msra.mxu0 0.0
    %187 = vmatprep.subr.mxu0 0.0
    %188 = vmatpush1.xpose.msra.mxu0 0.0
    %189 = vmatprep.subr.mxu0 0.0
    %190 = vmatpush1.xpose.msra.mxu0 0.0
    %191 = vmatprep.subr.mxu0 0.0
    %192 = vmatpush1.xpose.msra.mxu0 0.0
    %193 = vmatprep.subr.mxu0 0.0
    %194 = vmatpush1.xpose.msra.mxu0 0.0
    %195 = vmatprep.subr.mxu0 0.0
    %196 = vmatpush1.xpose.msra.mxu0 0.0
    %197 = vmatprep.subr.mxu0 0.0
    %198 = vmatpush1.xpose.msra.mxu0 0.0
    %199 = vmatprep.subr.mxu0 0.0
    %200 = vmatpush1.xpose.msra.mxu0 0.0
    %201 = vmatprep.subr.mxu0 0.0
    %202 = vmatpush1.xpose.msra.mxu0 0.0
    %203 = vmatprep.subr.mxu0 0.0
    %204 = vmatpush1.xpose.msra.mxu0 0.0
    %205 = vmatprep.subr.mxu0 0.0
    %206 = vmatpush1.xpose.msra.mxu0 0.0
    %207 = vmatprep.subr.mxu0 0.0
    %208 = vmatpush1.xpose.msra.mxu0 0.0
    %209 = vmatprep.subr.mxu0 0.0
    %210 = vmatpush1.xpose.msra.mxu0 0.0
    %211 = vmatprep.subr.mxu0 0.0
    %212 = vmatpush1.xpose.msra.mxu0 0.0
    %213 = vmatprep.subr.mxu0 0.0
    %214 = vmatpush1.xpose.msra.mxu0 0.0
    %215 = vmatprep.subr.mxu0 0.0
    %216 = vmatpush1.xpose.msra.mxu0 0.0
    %217 = vmatprep.subr.mxu0 0.0
    %218 = vmatpush1.xpose.msra.mxu0 0.0
    %219 = vmatprep.subr.mxu0 0.0
    %220 = vmatpush1.xpose.msra.mxu0 0.0
    %221 = vmatprep.subr.mxu0 0.0
    %222 = vmatpush1.xpose.msra.mxu0 0.0
    %223 = vmatprep.subr.mxu0 0.0
    %224 = vmatpush1.xpose.msra.mxu0 0.0
    %225 = vmatprep.subr.mxu0 0.0
    %226 = vmatpush1.xpose.msra.mxu0 0.0
    %227 = vmatprep.subr.mxu0 0.0
    %228 = vmatpush1.xpose.msra.mxu0 0.0
    %229 = vmatprep.subr.mxu0 0.0
    %230 = vmatpush1.xpose.msra.mxu0 0.0
    %231 = vmatprep.subr.mxu0 0.0
    %232 = vmatpush1.xpose.msra.mxu0 0.0
    %233 = vmatprep.subr.mxu0 0.0
    %234 = vmatpush1.xpose.msra.mxu0 0.0
    %235 = vmatprep.mubr.f32.mxu0 0.0
    %236 = vmatmul.mubr.f32.gmra.mrb[0].mxu0 %v167
    %v237 = vpop.f32.mrb[0].mxu0
    %v238 = vadd.f32 0.0, %v237
    %v239 = vpop.f32.mrb[0].mxu0
    %240 = vdwg.mxu0
    %242 = vrot.lane.b32.xlu0 %v160, 96
    %v243 = vpop.permute.xlu0 %242
    %v244 = vsel %vm166, %v160, 0
    %v246 = vsel %vm166, %v243, 0
    %248 = vmatprep.subr.mxu0 0.0
    %249 = vmatpush1.xpose.msra.mxu0 %v246
    %250 = vmatprep.subr.mxu0 0.0
    %251 = vmatpush1.xpose.msra.mxu0 0.0
    %252 = vmatprep.subr.mxu0 0.0
    %253 = vmatpush1.xpose.msra.mxu0 0.0
    %254 = vmatprep.subr.mxu0 0.0
    %255 = vmatpush1.xpose.msra.mxu0 0.0
    %256 = vmatprep.subr.mxu0 0.0
    %257 = vmatpush1.xpose.msra.mxu0 0.0
    %258 = vmatprep.subr.mxu0 0.0
    %259 = vmatpush1.xpose.msra.mxu0 0.0
    %260 = vmatprep.subr.mxu0 0.0
    %261 = vmatpush1.xpose.msra.mxu0 0.0
    %262 = vmatprep.subr.mxu0 0.0
    %263 = vmatpush1.xpose.msra.mxu0 0.0
    %264 = vmatprep.subr.mxu0 0.0
    %265 = vmatpush1.xpose.msra.mxu0 0.0
    %266 = vmatprep.subr.mxu0 0.0
    %267 = vmatpush1.xpose.msra.mxu0 0.0
    %268 = vmatprep.subr.mxu0 0.0
    %269 = vmatpush1.xpose.msra.mxu0 0.0
    %270 = vmatprep.subr.mxu0 0.0
    %271 = vmatpush1.xpose.msra.mxu0 0.0
    %272 = vmatprep.subr.mxu0 0.0
    %273 = vmatpush1.xpose.msra.mxu0 0.0
    %274 = vmatprep.subr.mxu0 0.0
    %275 = vmatpush1.xpose.msra.mxu0 0.0
    %276 = vmatprep.subr.mxu0 0.0
    %277 = vmatpush1.xpose.msra.mxu0 0.0
    %278 = vmatprep.subr.mxu0 0.0
    %279 = vmatpush1.xpose.msra.mxu0 0.0
    %280 = vmatprep.subr.mxu0 0.0
    %281 = vmatpush1.xpose.msra.mxu0 0.0
    %282 = vmatprep.subr.mxu0 0.0
    %283 = vmatpush1.xpose.msra.mxu0 0.0
    %284 = vmatprep.subr.mxu0 0.0
    %285 = vmatpush1.xpose.msra.mxu0 0.0
    %286 = vmatprep.subr.mxu0 0.0
    %287 = vmatpush1.xpose.msra.mxu0 0.0
    %288 = vmatprep.subr.mxu0 0.0
    %289 = vmatpush1.xpose.msra.mxu0 0.0
    %290 = vmatprep.subr.mxu0 0.0
    %291 = vmatpush1.xpose.msra.mxu0 0.0
    %292 = vmatprep.subr.mxu0 0.0
    %293 = vmatpush1.xpose.msra.mxu0 0.0
    %294 = vmatprep.subr.mxu0 0.0
    %295 = vmatpush1.xpose.msra.mxu0 0.0
    %296 = vmatprep.subr.mxu0 0.0
    %297 = vmatpush1.xpose.msra.mxu0 0.0
    %298 = vmatprep.subr.mxu0 0.0
    %299 = vmatpush1.xpose.msra.mxu0 0.0
    %300 = vmatprep.subr.mxu0 0.0
    %301 = vmatpush1.xpose.msra.mxu0 0.0
    %302 = vmatprep.subr.mxu0 0.0
    %303 = vmatpush1.xpose.msra.mxu0 0.0
    %304 = vmatprep.subr.mxu0 0.0
    %305 = vmatpush1.xpose.msra.mxu0 0.0
    %306 = vmatprep.subr.mxu0 0.0
    %307 = vmatpush1.xpose.msra.mxu0 0.0
    %308 = vmatprep.subr.mxu0 0.0
    %309 = vmatpush1.xpose.msra.mxu0 0.0
    %310 = vmatprep.subr.mxu0 0.0
    %311 = vmatpush1.xpose.msra.mxu0 0.0
    %312 = vmatprep.mubr.f32.mxu0 0.0
    %313 = vmatmul.mubr.f32.gmra.mrb[0].mxu0 %v244
    %v314 = vpop.f32.mrb[0].mxu0
    %v315 = vadd.f32 0.0, %v314
    %v316 = vpop.f32.mrb[0].mxu0
    %317 = vdwg.mxu0
    %v318 = vmul.f32 %v238, 0.35355338
    %v319 = vmul.f32 %v315, 0.35355338
    %v320 = vsel %vm166, %v318, -inf
    %321 = vmax.xlane.f32.xlu0 %v320
    %v322 = vpop.xlane.xlu0 %321
    %v323 = vsel %vm166, %v319, -inf
    %324 = vmax.xlane.f32.xlu0 %v323
    %v325 = vpop.xlane.xlu0 %324
    %v326 = vsub.f32 %v318, %v322
    %v327 = vsub.f32 %v319, %v325
    %v328 = vmul.f32 %v326, 1.442695
    %v329 = vpow.pop %v328
    %v330 = vmul.f32 %v327, 1.442695
    %v331 = vpow.pop %v330
    %v332 = vsel %vm166, %v329, 0.0
    %333 = vadd.xlane.f32.xlu0 %v332
    %v334 = vpop.xlane.xlu0 %333
    %v335 = vsel %vm166, %v331, 0.0
    %336 = vadd.xlane.f32.xlu0 %v335
    %v337 = vpop.xlane.xlu0 %336
    %v338 = vrcp.pop %v334
    %v339 = vmul.f32 %v329, %v338
    %v340 = vrcp.pop %v337
    %v341 = vmul.f32 %v331, %v340
    %342 = vrot.lane.b32.xlu0 %v155, 64
    %v343 = vpop.permute.xlu0 %342
    %v346 = vsel %vm166, %v339, 0
    %348 = vmatprep.subr.mxu0 0.0
    %349 = vmatpush1.msra.mxu0 %v343
    %350 = vmatprep.subr.mxu0 0.0
    %351 = vmatpush1.msra.mxu0 0.0
    %352 = vmatprep.subr.mxu0 0.0
    %353 = vmatpush1.msra.mxu0 0.0
    %354 = vmatprep.subr.mxu0 0.0
    %355 = vmatpush1.msra.mxu0 0.0
    %356 = vmatprep.subr.mxu0 0.0
    %357 = vmatpush1.msra.mxu0 0.0
    %358 = vmatprep.subr.mxu0 0.0
    %359 = vmatpush1.msra.mxu0 0.0
    %360 = vmatprep.subr.mxu0 0.0
    %361 = vmatpush1.msra.mxu0 0.0
    %362 = vmatprep.subr.mxu0 0.0
    %363 = vmatpush1.msra.mxu0 0.0
    %364 = vmatprep.subr.mxu0 0.0
    %365 = vmatpush1.msra.mxu0 0.0
    %366 = vmatprep.subr.mxu0 0.0
    %367 = vmatpush1.msra.mxu0 0.0
    %368 = vmatprep.subr.mxu0 0.0
    %369 = vmatpush1.msra.mxu0 0.0
    %370 = vmatprep.subr.mxu0 0.0
    %371 = vmatpush1.msra.mxu0 0.0
    %372 = vmatprep.subr.mxu0 0.0
    %373 = vmatpush1.msra.mxu0 0.0
    %374 = vmatprep.subr.mxu0 0.0
    %375 = vmatpush1.msra.mxu0 0.0
    %376 = vmatprep.subr.mxu0 0.0
    %377 = vmatpush1.msra.mxu0 0.0
    %378 = vmatprep.subr.mxu0 0.0
    %379 = vmatpush1.msra.mxu0 0.0
    %380 = vmatprep.subr.mxu0 0.0
    %381 = vmatpush1.msra.mxu0 0.0
    %382 = vmatprep.subr.mxu0 0.0
    %383 = vmatpush1.msra.mxu0 0.0
    %384 = vmatprep.subr.mxu0 0.0
    %385 = vmatpush1.msra.mxu0 0.0
    %386 = vmatprep.subr.mxu0 0.0
    %387 = vmatpush1.msra.mxu0 0.0
    %388 = vmatprep.subr.mxu0 0.0
    %389 = vmatpush1.msra.mxu0 0.0
    %390 = vmatprep.subr.mxu0 0.0
    %391 = vmatpush1.msra.mxu0 0.0
    %392 = vmatprep.subr.mxu0 0.0
    %393 = vmatpush1.msra.mxu0 0.0
    %394 = vmatprep.subr.mxu0 0.0
    %395 = vmatpush1.msra.mxu0 0.0
    %396 = vmatprep.subr.mxu0 0.0
    %397 = vmatpush1.msra.mxu0 0.0
    %398 = vmatprep.subr.mxu0 0.0
    %399 = vmatpush1.msra.mxu0 0.0
    %400 = vmatprep.subr.mxu0 0.0
    %401 = vmatpush1.msra.mxu0 0.0
    %402 = vmatprep.subr.mxu0 0.0
    %403 = vmatpush1.msra.mxu0 0.0
    %404 = vmatprep.subr.mxu0 0.0
    %405 = vmatpush1.msra.mxu0 0.0
    %406 = vmatprep.subr.mxu0 0.0
    %407 = vmatpush1.msra.mxu0 0.0
    %408 = vmatprep.subr.mxu0 0.0
    %409 = vmatpush1.msra.mxu0 0.0
    %410 = vmatprep.subr.mxu0 0.0
    %411 = vmatpush1.msra.mxu0 0.0
    %412 = vmatprep.mubr.f32.mxu0 0.0
    %413 = vmatmul.mubr.f32.gmra.mrb[0].mxu0 %v346
    %v414 = vpop.f32.mrb[0].mxu0
    %v415 = vadd.f32 0.0, %v414
    %v416 = vpop.f32.mrb[0].mxu0
    %417 = vdwg.mxu0
    %418 = vrot.lane.b32.xlu0 %v160, 64
    %v419 = vpop.permute.xlu0 %418
    %v422 = vsel %vm166, %v341, 0
    %424 = vmatprep.subr.mxu0 0.0
    %425 = vmatpush1.msra.mxu0 %v419
    %426 = vmatprep.subr.mxu0 0.0
    %427 = vmatpush1.msra.mxu0 0.0
    %428 = vmatprep.subr.mxu0 0.0
    %429 = vmatpush1.msra.mxu0 0.0
    %430 = vmatprep.subr.mxu0 0.0
    %431 = vmatpush1.msra.mxu0 0.0
    %432 = vmatprep.subr.mxu0 0.0
    %433 = vmatpush1.msra.mxu0 0.0
    %434 = vmatprep.subr.mxu0 0.0
    %435 = vmatpush1.msra.mxu0 0.0
    %436 = vmatprep.subr.mxu0 0.0
    %437 = vmatpush1.msra.mxu0 0.0
    %438 = vmatprep.subr.mxu0 0.0
    %439 = vmatpush1.msra.mxu0 0.0
    %440 = vmatprep.subr.mxu0 0.0
    %441 = vmatpush1.msra.mxu0 0.0
    %442 = vmatprep.subr.mxu0 0.0
    %443 = vmatpush1.msra.mxu0 0.0
    %444 = vmatprep.subr.mxu0 0.0
    %445 = vmatpush1.msra.mxu0 0.0
    %446 = vmatprep.subr.mxu0 0.0
    %447 = vmatpush1.msra.mxu0 0.0
    %448 = vmatprep.subr.mxu0 0.0
    %449 = vmatpush1.msra.mxu0 0.0
    %450 = vmatprep.subr.mxu0 0.0
    %451 = vmatpush1.msra.mxu0 0.0
    %452 = vmatprep.subr.mxu0 0.0
    %453 = vmatpush1.msra.mxu0 0.0
    %454 = vmatprep.subr.mxu0 0.0
    %455 = vmatpush1.msra.mxu0 0.0
    %456 = vmatprep.subr.mxu0 0.0
    %457 = vmatpush1.msra.mxu0 0.0
    %458 = vmatprep.subr.mxu0 0.0
    %459 = vmatpush1.msra.mxu0 0.0
    %460 = vmatprep.subr.mxu0 0.0
    %461 = vmatpush1.msra.mxu0 0.0
    %462 = vmatprep.subr.mxu0 0.0
    %463 = vmatpush1.msra.mxu0 0.0
    %464 = vmatprep.subr.mxu0 0.0
    %465 = vmatpush1.msra.mxu0 0.0
    %466 = vmatprep.subr.mxu0 0.0
    %467 = vmatpush1.msra.mxu0 0.0
    %468 = vmatprep.subr.mxu0 0.0
    %469 = vmatpush1.msra.mxu0 0.0
    %470 = vmatprep.subr.mxu0 0.0
    %471 = vmatpush1.msra.mxu0 0.0
    %472 = vmatprep.subr.mxu0 0.0
    %473 = vmatpush1.msra.mxu0 0.0
    %474 = vmatprep.subr.mxu0 0.0
    %475 = vmatpush1.msra.mxu0 0.0
    %476 = vmatprep.subr.mxu0 0.0
    %477 = vmatpush1.msra.mxu0 0.0
    %478 = vmatprep.subr.mxu0 0.0
    %479 = vmatpush1.msra.mxu0 0.0
    %480 = vmatprep.subr.mxu0 0.0
    %481 = vmatpush1.msra.mxu0 0.0
    %482 = vmatprep.subr.mxu0 0.0
    %483 = vmatpush1.msra.mxu0 0.0
    %484 = vmatprep.subr.mxu0 0.0
    %485 = vmatpush1.msra.mxu0 0.0
    %486 = vmatprep.subr.mxu0 0.0
    %487 = vmatpush1.msra.mxu0 0.0
    %488 = vmatprep.mubr.f32.mxu0 0.0
    %489 = vmatmul.mubr.f32.gmra.mrb[0].mxu0 %v422
    %v490 = vpop.f32.mrb[0].mxu0
    %v491 = vadd.f32 0.0, %v490
    %v492 = vpop.f32.mrb[0].mxu0
    %493 = vdwg.mxu0
    %494 = vrot.lane.b32.xlu0 %v155, 120
    %v495 = vpop.permute.xlu0 %494
    %496 = vrot.lane.b32.xlu0 %v155, 88
    %v497 = vpop.permute.xlu0 %496
    %v498 = vsel %vm166, %v495, 0
    %v500 = vsel %vm166, %v497, 0
    %502 = vmatprep.subr.mxu0 0.0
    %503 = vmatpush1.xpose.msra.mxu0 %v500
    %504 = vmatprep.subr.mxu0 0.0
    %505 = vmatpush1.xpose.msra.mxu0 0.0
    %506 = vmatprep.subr.mxu0 0.0
    %507 = vmatpush1.xpose.msra.mxu0 0.0
    %508 = vmatprep.subr.mxu0 0.0
    %509 = vmatpush1.xpose.msra.mxu0 0.0
    %510 = vmatprep.subr.mxu0 0.0
    %511 = vmatpush1.xpose.msra.mxu0 0.0
    %512 = vmatprep.subr.mxu0 0.0
    %513 = vmatpush1.xpose.msra.mxu0 0.0
    %514 = vmatprep.subr.mxu0 0.0
    %515 = vmatpush1.xpose.msra.mxu0 0.0
    %516 = vmatprep.subr.mxu0 0.0
    %517 = vmatpush1.xpose.msra.mxu0 0.0
    %518 = vmatprep.subr.mxu0 0.0
    %519 = vmatpush1.xpose.msra.mxu0 0.0
    %520 = vmatprep.subr.mxu0 0.0
    %521 = vmatpush1.xpose.msra.mxu0 0.0
    %522 = vmatprep.subr.mxu0 0.0
    %523 = vmatpush1.xpose.msra.mxu0 0.0
    %524 = vmatprep.subr.mxu0 0.0
    %525 = vmatpush1.xpose.msra.mxu0 0.0
    %526 = vmatprep.subr.mxu0 0.0
    %527 = vmatpush1.xpose.msra.mxu0 0.0
    %528 = vmatprep.subr.mxu0 0.0
    %529 = vmatpush1.xpose.msra.mxu0 0.0
    %530 = vmatprep.subr.mxu0 0.0
    %531 = vmatpush1.xpose.msra.mxu0 0.0
    %532 = vmatprep.subr.mxu0 0.0
    %533 = vmatpush1.xpose.msra.mxu0 0.0
    %534 = vmatprep.subr.mxu0 0.0
    %535 = vmatpush1.xpose.msra.mxu0 0.0
    %536 = vmatprep.subr.mxu0 0.0
    %537 = vmatpush1.xpose.msra.mxu0 0.0
    %538 = vmatprep.subr.mxu0 0.0
    %539 = vmatpush1.xpose.msra.mxu0 0.0
    %540 = vmatprep.subr.mxu0 0.0
    %541 = vmatpush1.xpose.msra.mxu0 0.0
    %542 = vmatprep.subr.mxu0 0.0
    %543 = vmatpush1.xpose.msra.mxu0 0.0
    %544 = vmatprep.subr.mxu0 0.0
    %545 = vmatpush1.xpose.msra.mxu0 0.0
    %546 = vmatprep.subr.mxu0 0.0
    %547 = vmatpush1.xpose.msra.mxu0 0.0
    %548 = vmatprep.subr.mxu0 0.0
    %549 = vmatpush1.xpose.msra.mxu0 0.0
    %550 = vmatprep.subr.mxu0 0.0
    %551 = vmatpush1.xpose.msra.mxu0 0.0
    %552 = vmatprep.subr.mxu0 0.0
    %553 = vmatpush1.xpose.msra.mxu0 0.0
    %554 = vmatprep.subr.mxu0 0.0
    %555 = vmatpush1.xpose.msra.mxu0 0.0
    %556 = vmatprep.subr.mxu0 0.0
    %557 = vmatpush1.xpose.msra.mxu0 0.0
    %558 = vmatprep.subr.mxu0 0.0
    %559 = vmatpush1.xpose.msra.mxu0 0.0
    %560 = vmatprep.subr.mxu0 0.0
    %561 = vmatpush1.xpose.msra.mxu0 0.0
    %562 = vmatprep.subr.mxu0 0.0
    %563 = vmatpush1.xpose.msra.mxu0 0.0
    %564 = vmatprep.subr.mxu0 0.0
    %565 = vmatpush1.xpose.msra.mxu0 0.0
    %566 = vmatprep.mubr.f32.mxu0 0.0
    %567 = vmatmul.mubr.f32.gmra.mrb[0].mxu0 %v498
    %v568 = vpop.f32.mrb[0].mxu0
    %v569 = vadd.f32 0.0, %v568
    %v570 = vpop.f32.mrb[0].mxu0
    %571 = vdwg.mxu0
    %572 = vrot.lane.b32.xlu0 %v160, 120
    %v573 = vpop.permute.xlu0 %572
    %574 = vrot.lane.b32.xlu0 %v160, 88
    %v575 = vpop.permute.xlu0 %574
    %v576 = vsel %vm166, %v573, 0
    %v578 = vsel %vm166, %v575, 0
    %580 = vmatprep.subr.mxu0 0.0
    %581 = vmatpush1.xpose.msra.mxu0 %v578
    %582 = vmatprep.subr.mxu0 0.0
    %583 = vmatpush1.xpose.msra.mxu0 0.0
    %584 = vmatprep.subr.mxu0 0.0
    %585 = vmatpush1.xpose.msra.mxu0 0.0
    %586 = vmatprep.subr.mxu0 0.0
    %587 = vmatpush1.xpose.msra.mxu0 0.0
    %588 = vmatprep.subr.mxu0 0.0
    %589 = vmatpush1.xpose.msra.mxu0 0.0
    %590 = vmatprep.subr.mxu0 0.0
    %591 = vmatpush1.xpose.msra.mxu0 0.0
    %592 = vmatprep.subr.mxu0 0.0
    %593 = vmatpush1.xpose.msra.mxu0 0.0
    %594 = vmatprep.subr.mxu0 0.0
    %595 = vmatpush1.xpose.msra.mxu0 0.0
    %596 = vmatprep.subr.mxu0 0.0
    %597 = vmatpush1.xpose.msra.mxu0 0.0
    %598 = vmatprep.subr.mxu0 0.0
    %599 = vmatpush1.xpose.msra.mxu0 0.0
    %600 = vmatprep.subr.mxu0 0.0
    %601 = vmatpush1.xpose.msra.mxu0 0.0
    %602 = vmatprep.subr.mxu0 0.0
    %603 = vmatpush1.xpose.msra.mxu0 0.0
    %604 = vmatprep.subr.mxu0 0.0
    %605 = vmatpush1.xpose.msra.mxu0 0.0
    %606 = vmatprep.subr.mxu0 0.0
    %607 = vmatpush1.xpose.msra.mxu0 0.0
    %608 = vmatprep.subr.mxu0 0.0
    %609 = vmatpush1.xpose.msra.mxu0 0.0
    %610 = vmatprep.subr.mxu0 0.0
    %611 = vmatpush1.xpose.msra.mxu0 0.0
    %612 = vmatprep.subr.mxu0 0.0
    %613 = vmatpush1.xpose.msra.mxu0 0.0
    %614 = vmatprep.subr.mxu0 0.0
    %615 = vmatpush1.xpose.msra.mxu0 0.0
    %616 = vmatprep.subr.mxu0 0.0
    %617 = vmatpush1.xpose.msra.mxu0 0.0
    %618 = vmatprep.subr.mxu0 0.0
    %619 = vmatpush1.xpose.msra.mxu0 0.0
    %620 = vmatprep.subr.mxu0 0.0
    %621 = vmatpush1.xpose.msra.mxu0 0.0
    %622 = vmatprep.subr.mxu0 0.0
    %623 = vmatpush1.xpose.msra.mxu0 0.0
    %624 = vmatprep.subr.mxu0 0.0
    %625 = vmatpush1.xpose.msra.mxu0 0.0
    %626 = vmatprep.subr.mxu0 0.0
    %627 = vmatpush1.xpose.msra.mxu0 0.0
    %628 = vmatprep.subr.mxu0 0.0
    %629 = vmatpush1.xpose.msra.mxu0 0.0
    %630 = vmatprep.subr.mxu0 0.0
    %631 = vmatpush1.xpose.msra.mxu0 0.0
    %632 = vmatprep.subr.mxu0 0.0
    %633 = vmatpush1.xpose.msra.mxu0 0.0
    %634 = vmatprep.subr.mxu0 0.0
    %635 = vmatpush1.xpose.msra.mxu0 0.0
    %636 = vmatprep.subr.mxu0 0.0
    %637 = vmatpush1.xpose.msra.mxu0 0.0
    %638 = vmatprep.subr.mxu0 0.0
    %639 = vmatpush1.xpose.msra.mxu0 0.0
    %640 = vmatprep.subr.mxu0 0.0
    %641 = vmatpush1.xpose.msra.mxu0 0.0
    %642 = vmatprep.subr.mxu0 0.0
    %643 = vmatpush1.xpose.msra.mxu0 0.0
    %644 = vmatprep.mubr.f32.mxu0 0.0
    %645 = vmatmul.mubr.f32.gmra.mrb[0].mxu0 %v576
    %v646 = vpop.f32.mrb[0].mxu0
    %v647 = vadd.f32 0.0, %v646
    %v648 = vpop.f32.mrb[0].mxu0
    %649 = vdwg.mxu0
    %v650 = vmul.f32 %v569, 0.35355338
    %v651 = vmul.f32 %v647, 0.35355338
    %v652 = vsel %vm166, %v650, -inf
    %653 = vmax.xlane.f32.xlu0 %v652
    %v654 = vpop.xlane.xlu0 %653
    %v655 = vsel %vm166, %v651, -inf
    %656 = vmax.xlane.f32.xlu0 %v655
    %v657 = vpop.xlane.xlu0 %656
    %v658 = vsub.f32 %v650, %v654
    %v659 = vsub.f32 %v651, %v657
    %v660 = vmul.f32 %v658, 1.442695
    %v661 = vpow.pop %v660
    %v662 = vmul.f32 %v659, 1.442695
    %v663 = vpow.pop %v662
    %v664 = vsel %vm166, %v661, 0.0
    %665 = vadd.xlane.f32.xlu0 %v664
    %v666 = vpop.xlane.xlu0 %665
    %v667 = vsel %vm166, %v663, 0.0
    %668 = vadd.xlane.f32.xlu0 %v667
    %v669 = vpop.xlane.xlu0 %668
    %v670 = vrcp.pop %v666
    %v671 = vmul.f32 %v661, %v670
    %v672 = vrcp.pop %v669
    %v673 = vmul.f32 %v663, %v672
    %674 = vrot.lane.b32.xlu0 %v155, 56
    %v675 = vpop.permute.xlu0 %674
    %v678 = vsel %vm166, %v671, 0
    %680 = vmatprep.subr.mxu0 0.0
    %681 = vmatpush1.msra.mxu0 %v675
    %682 = vmatprep.subr.mxu0 0.0
    %683 = vmatpush1.msra.mxu0 0.0
    %684 = vmatprep.subr.mxu0 0.0
    %685 = vmatpush1.msra.mxu0 0.0
    %686 = vmatprep.subr.mxu0 0.0
    %687 = vmatpush1.msra.mxu0 0.0
    %688 = vmatprep.subr.mxu0 0.0
    %689 = vmatpush1.msra.mxu0 0.0
    %690 = vmatprep.subr.mxu0 0.0
    %691 = vmatpush1.msra.mxu0 0.0
    %692 = vmatprep.subr.mxu0 0.0
    %693 = vmatpush1.msra.mxu0 0.0
    %694 = vmatprep.subr.mxu0 0.0
    %695 = vmatpush1.msra.mxu0 0.0
    %696 = vmatprep.subr.mxu0 0.0
    %697 = vmatpush1.msra.mxu0 0.0
    %698 = vmatprep.subr.mxu0 0.0
    %699 = vmatpush1.msra.mxu0 0.0
    %700 = vmatprep.subr.mxu0 0.0
    %701 = vmatpush1.msra.mxu0 0.0
    %702 = vmatprep.subr.mxu0 0.0
    %703 = vmatpush1.msra.mxu0 0.0
    %704 = vmatprep.subr.mxu0 0.0
    %705 = vmatpush1.msra.mxu0 0.0
    %706 = vmatprep.subr.mxu0 0.0
    %707 = vmatpush1.msra.mxu0 0.0
    %708 = vmatprep.subr.mxu0 0.0
    %709 = vmatpush1.msra.mxu0 0.0
    %710 = vmatprep.subr.mxu0 0.0
    %711 = vmatpush1.msra.mxu0 0.0
    %712 = vmatprep.subr.mxu0 0.0
    %713 = vmatpush1.msra.mxu0 0.0
    %714 = vmatprep.subr.mxu0 0.0
    %715 = vmatpush1.msra.mxu0 0.0
    %716 = vmatprep.subr.mxu0 0.0
    %717 = vmatpush1.msra.mxu0 0.0
    %718 = vmatprep.subr.mxu0 0.0
    %719 = vmatpush1.msra.mxu0 0.0
    %720 = vmatprep.subr.mxu0 0.0
    %721 = vmatpush1.msra.mxu0 0.0
    %722 = vmatprep.subr.mxu0 0.0
    %723 = vmatpush1.msra.mxu0 0.0
    %724 = vmatprep.subr.mxu0 0.0
    %725 = vmatpush1.msra.mxu0 0.0
    %726 = vmatprep.subr.mxu0 0.0
    %727 = vmatpush1.msra.mxu0 0.0
    %728 = vmatprep.subr.mxu0 0.0
    %729 = vmatpush1.msra.mxu0 0.0
    %730 = vmatprep.subr.mxu0 0.0
    %731 = vmatpush1.msra.mxu0 0.0
    %732 = vmatprep.subr.mxu0 0.0
    %733 = vmatpush1.msra.mxu0 0.0
    %734 = vmatprep.subr.mxu0 0.0
    %735 = vmatpush1.msra.mxu0 0.0
    %736 = vmatprep.subr.mxu0 0.0
    %737 = vmatpush1.msra.mxu0 0.0
    %738 = vmatprep.subr.mxu0 0.0
    %739 = vmatpush1.msra.mxu0 0.0
    %740 = vmatprep.subr.mxu0 0.0
    %741 = vmatpush1.msra.mxu0 0.0
    %742 = vmatprep.subr.mxu0 0.0
    %743 = vmatpush1.msra.mxu0 0.0
    %744 = vmatprep.mubr.f32.mxu0 0.0
    %745 = vmatmul.mubr.f32.gmra.mrb[0].mxu0 %v678
    %v746 = vpop.f32.mrb[0].mxu0
    %v747 = vadd.f32 0.0, %v746
    %v748 = vpop.f32.mrb[0].mxu0
    %749 = vdwg.mxu0
    %750 = vrot.lane.b32.xlu0 %v160, 56
    %v751 = vpop.permute.xlu0 %750
    %v754 = vsel %vm166, %v673, 0
    %756 = vmatprep.subr.mxu0 0.0
    %757 = vmatpush1.msra.mxu0 %v751
    %758 = vmatprep.subr.mxu0 0.0
    %759 = vmatpush1.msra.mxu0 0.0
    %760 = vmatprep.subr.mxu0 0.0
    %761 = vmatpush1.msra.mxu0 0.0
    %762 = vmatprep.subr.mxu0 0.0
    %763 = vmatpush1.msra.mxu0 0.0
    %764 = vmatprep.subr.mxu0 0.0
    %765 = vmatpush1.msra.mxu0 0.0
    %766 = vmatprep.subr.mxu0 0.0
    %767 = vmatpush1.msra.mxu0 0.0
    %768 = vmatprep.subr.mxu0 0.0
    %769 = vmatpush1.msra.mxu0 0.0
    %770 = vmatprep.subr.mxu0 0.0
    %771 = vmatpush1.msra.mxu0 0.0
    %772 = vmatprep.subr.mxu0 0.0
    %773 = vmatpush1.msra.mxu0 0.0
    %774 = vmatprep.subr.mxu0 0.0
    %775 = vmatpush1.msra.mxu0 0.0
    %776 = vmatprep.subr.mxu0 0.0
    %777 = vmatpush1.msra.mxu0 0.0
    %778 = vmatprep.subr.mxu0 0.0
    %779 = vmatpush1.msra.mxu0 0.0
    %780 = vmatprep.subr.mxu0 0.0
    %781 = vmatpush1.msra.mxu0 0.0
    %782 = vmatprep.subr.mxu0 0.0
    %783 = vmatpush1.msra.mxu0 0.0
    %784 = vmatprep.subr.mxu0 0.0
    %785 = vmatpush1.msra.mxu0 0.0
    %786 = vmatprep.subr.mxu0 0.0
    %787 = vmatpush1.msra.mxu0 0.0
    %788 = vmatprep.subr.mxu0 0.0
    %789 = vmatpush1.msra.mxu0 0.0
    %790 = vmatprep.subr.mxu0 0.0
    %791 = vmatpush1.msra.mxu0 0.0
    %792 = vmatprep.subr.mxu0 0.0
    %793 = vmatpush1.msra.mxu0 0.0
    %794 = vmatprep.subr.mxu0 0.0
    %795 = vmatpush1.msra.mxu0 0.0
    %796 = vmatprep.subr.mxu0 0.0
    %797 = vmatpush1.msra.mxu0 0.0
    %798 = vmatprep.subr.mxu0 0.0
    %799 = vmatpush1.msra.mxu0 0.0
    %800 = vmatprep.subr.mxu0 0.0
    %801 = vmatpush1.msra.mxu0 0.0
    %802 = vmatprep.subr.mxu0 0.0
    %803 = vmatpush1.msra.mxu0 0.0
    %804 = vmatprep.subr.mxu0 0.0
    %805 = vmatpush1.msra.mxu0 0.0
    %806 = vmatprep.subr.mxu0 0.0
    %807 = vmatpush1.msra.mxu0 0.0
    %808 = vmatprep.subr.mxu0 0.0
    %809 = vmatpush1.msra.mxu0 0.0
    %810 = vmatprep.subr.mxu0 0.0
    %811 = vmatpush1.msra.mxu0 0.0
    %812 = vmatprep.subr.mxu0 0.0
    %813 = vmatpush1.msra.mxu0 0.0
    %814 = vmatprep.subr.mxu0 0.0
    %815 = vmatpush1.msra.mxu0 0.0
    %816 = vmatprep.subr.mxu0 0.0
    %817 = vmatpush1.msra.mxu0 0.0
    %818 = vmatprep.subr.mxu0 0.0
    %819 = vmatpush1.msra.mxu0 0.0
    %820 = vmatprep.mubr.f32.mxu0 0.0
    %821 = vmatmul.mubr.f32.gmra.mrb[0].mxu0 %v754
    %v822 = vpop.f32.mrb[0].mxu0
    %v823 = vadd.f32 0.0, %v822
    %v824 = vpop.f32.mrb[0].mxu0
    %825 = vdwg.mxu0
    %826 = vrot.lane.b32.xlu0 %v155, 112
    %v827 = vpop.permute.xlu0 %826
    %828 = vrot.lane.b32.xlu0 %v155, 80
    %v829 = vpop.permute.xlu0 %828
    %v830 = vsel %vm166, %v827, 0
    %v832 = vsel %vm166, %v829, 0
    %834 = vmatprep.subr.mxu0 0.0
    %835 = vmatpush1.xpose.msra.mxu0 %v832
    %836 = vmatprep.subr.mxu0 0.0
    %837 = vmatpush1.xpose.msra.mxu0 0.0
    %838 = vmatprep.subr.mxu0 0.0
    %839 = vmatpush1.xpose.msra.mxu0 0.0
    %840 = vmatprep.subr.mxu0 0.0
    %841 = vmatpush1.xpose.msra.mxu0 0.0
    %842 = vmatprep.subr.mxu0 0.0
    %843 = vmatpush1.xpose.msra.mxu0 0.0
    %844 = vmatprep.subr.mxu0 0.0
    %845 = vmatpush1.xpose.msra.mxu0 0.0
    %846 = vmatprep.subr.mxu0 0.0
    %847 = vmatpush1.xpose.msra.mxu0 0.0
    %848 = vmatprep.subr.mxu0 0.0
    %849 = vmatpush1.xpose.msra.mxu0 0.0
    %850 = vmatprep.subr.mxu0 0.0
    %851 = vmatpush1.xpose.msra.mxu0 0.0
    %852 = vmatprep.subr.mxu0 0.0
    %853 = vmatpush1.xpose.msra.mxu0 0.0
    %854 = vmatprep.subr.mxu0 0.0
    %855 = vmatpush1.xpose.msra.mxu0 0.0
    %856 = vmatprep.subr.mxu0 0.0
    %857 = vmatpush1.xpose.msra.mxu0 0.0
    %858 = vmatprep.subr.mxu0 0.0
    %859 = vmatpush1.xpose.msra.mxu0 0.0
    %860 = vmatprep.subr.mxu0 0.0
    %861 = vmatpush1.xpose.msra.mxu0 0.0
    %862 = vmatprep.subr.mxu0 0.0
    %863 = vmatpush1.xpose.msra.mxu0 0.0
    %864 = vmatprep.subr.mxu0 0.0
    %865 = vmatpush1.xpose.msra.mxu0 0.0
    %866 = vmatprep.subr.mxu0 0.0
    %867 = vmatpush1.xpose.msra.mxu0 0.0
    %868 = vmatprep.subr.mxu0 0.0
    %869 = vmatpush1.xpose.msra.mxu0 0.0
    %870 = vmatprep.subr.mxu0 0.0
    %871 = vmatpush1.xpose.msra.mxu0 0.0
    %872 = vmatprep.subr.mxu0 0.0
    %873 = vmatpush1.xpose.msra.mxu0 0.0
    %874 = vmatprep.subr.mxu0 0.0
    %875 = vmatpush1.xpose.msra.mxu0 0.0
    %876 = vmatprep.subr.mxu0 0.0
    %877 = vmatpush1.xpose.msra.mxu0 0.0
    %878 = vmatprep.subr.mxu0 0.0
    %879 = vmatpush1.xpose.msra.mxu0 0.0
    %880 = vmatprep.subr.mxu0 0.0
    %881 = vmatpush1.xpose.msra.mxu0 0.0
    %882 = vmatprep.subr.mxu0 0.0
    %883 = vmatpush1.xpose.msra.mxu0 0.0
    %884 = vmatprep.subr.mxu0 0.0
    %885 = vmatpush1.xpose.msra.mxu0 0.0
    %886 = vmatprep.subr.mxu0 0.0
    %887 = vmatpush1.xpose.msra.mxu0 0.0
    %888 = vmatprep.subr.mxu0 0.0
    %889 = vmatpush1.xpose.msra.mxu0 0.0
    %890 = vmatprep.subr.mxu0 0.0
    %891 = vmatpush1.xpose.msra.mxu0 0.0
    %892 = vmatprep.subr.mxu0 0.0
    %893 = vmatpush1.xpose.msra.mxu0 0.0
    %894 = vmatprep.subr.mxu0 0.0
    %895 = vmatpush1.xpose.msra.mxu0 0.0
    %896 = vmatprep.subr.mxu0 0.0
    %897 = vmatpush1.xpose.msra.mxu0 0.0
    %898 = vmatprep.mubr.f32.mxu0 0.0
    %899 = vmatmul.mubr.f32.gmra.mrb[0].mxu0 %v830
    %v900 = vpop.f32.mrb[0].mxu0
    %v901 = vadd.f32 0.0, %v900
    %v902 = vpop.f32.mrb[0].mxu0
    %903 = vdwg.mxu0
    %904 = vrot.lane.b32.xlu0 %v160, 112
    %v905 = vpop.permute.xlu0 %904
    %906 = vrot.lane.b32.xlu0 %v160, 80
    %v907 = vpop.permute.xlu0 %906
    %v908 = vsel %vm166, %v905, 0
    %v910 = vsel %vm166, %v907, 0
    %912 = vmatprep.subr.mxu0 0.0
    %913 = vmatpush1.xpose.msra.mxu0 %v910
    %914 = vmatprep.subr.mxu0 0.0
    %915 = vmatpush1.xpose.msra.mxu0 0.0
    %916 = vmatprep.subr.mxu0 0.0
    %917 = vmatpush1.xpose.msra.mxu0 0.0
    %918 = vmatprep.subr.mxu0 0.0
    %919 = vmatpush1.xpose.msra.mxu0 0.0
    %920 = vmatprep.subr.mxu0 0.0
    %921 = vmatpush1.xpose.msra.mxu0 0.0
    %922 = vmatprep.subr.mxu0 0.0
    %923 = vmatpush1.xpose.msra.mxu0 0.0
    %924 = vmatprep.subr.mxu0 0.0
    %925 = vmatpush1.xpose.msra.mxu0 0.0
    %926 = vmatprep.subr.mxu0 0.0
    %927 = vmatpush1.xpose.msra.mxu0 0.0
    %928 = vmatprep.subr.mxu0 0.0
    %929 = vmatpush1.xpose.msra.mxu0 0.0
    %930 = vmatprep.subr.mxu0 0.0
    %931 = vmatpush1.xpose.msra.mxu0 0.0
    %932 = vmatprep.subr.mxu0 0.0
    %933 = vmatpush1.xpose.msra.mxu0 0.0
    %934 = vmatprep.subr.mxu0 0.0
    %935 = vmatpush1.xpose.msra.mxu0 0.0
    %936 = vmatprep.subr.mxu0 0.0
    %937 = vmatpush1.xpose.msra.mxu0 0.0
    %938 = vmatprep.subr.mxu0 0.0
    %939 = vmatpush1.xpose.msra.mxu0 0.0
    %940 = vmatprep.subr.mxu0 0.0
    %941 = vmatpush1.xpose.msra.mxu0 0.0
    %942 = vmatprep.subr.mxu0 0.0
    %943 = vmatpush1.xpose.msra.mxu0 0.0
    %944 = vmatprep.subr.mxu0 0.0
    %945 = vmatpush1.xpose.msra.mxu0 0.0
    %946 = vmatprep.subr.mxu0 0.0
    %947 = vmatpush1.xpose.msra.mxu0 0.0
    %948 = vmatprep.subr.mxu0 0.0
    %949 = vmatpush1.xpose.msra.mxu0 0.0
    %950 = vmatprep.subr.mxu0 0.0
    %951 = vmatpush1.xpose.msra.mxu0 0.0
    %952 = vmatprep.subr.mxu0 0.0
    %953 = vmatpush1.xpose.msra.mxu0 0.0
    %954 = vmatprep.subr.mxu0 0.0
    %955 = vmatpush1.xpose.msra.mxu0 0.0
    %956 = vmatprep.subr.mxu0 0.0
    %957 = vmatpush1.xpose.msra.mxu0 0.0
    %958 = vmatprep.subr.mxu0 0.0
    %959 = vmatpush1.xpose.msra.mxu0 0.0
    %960 = vmatprep.subr.mxu0 0.0
    %961 = vmatpush1.xpose.msra.mxu0 0.0
    %962 = vmatprep.subr.mxu0 0.0
    %963 = vmatpush1.xpose.msra.mxu0 0.0
    %964 = vmatprep.subr.mxu0 0.0
    %965 = vmatpush1.xpose.msra.mxu0 0.0
    %966 = vmatprep.subr.mxu0 0.0
    %967 = vmatpush1.xpose.msra.mxu0 0.0
    %968 = vmatprep.subr.mxu0 0.0
    %969 = vmatpush1.xpose.msra.mxu0 0.0
    %970 = vmatprep.subr.mxu0 0.0
    %971 = vmatpush1.xpose.msra.mxu0 0.0
    %972 = vmatprep.subr.mxu0 0.0
    %973 = vmatpush1.xpose.msra.mxu0 0.0
    %974 = vmatprep.subr.mxu0 0.0
    %975 = vmatpush1.xpose.msra.mxu0 0.0
    %976 = vmatprep.mubr.f32.mxu0 0.0
    %977 = vmatmul.mubr.f32.gmra.mrb[0].mxu0 %v908
    %v978 = vpop.f32.mrb[0].mxu0
    %v979 = vadd.f32 0.0, %v978
    %v980 = vpop.f32.mrb[0].mxu0
    %981 = vdwg.mxu0
    %v982 = vmul.f32 %v901, 0.35355338
    %v983 = vmul.f32 %v979, 0.35355338
    %v984 = vsel %vm166, %v982, -inf
    %985 = vmax.xlane.f32.xlu0 %v984
    %v986 = vpop.xlane.xlu0 %985
    %v987 = vsel %vm166, %v983, -inf
    %988 = vmax.xlane.f32.xlu0 %v987
    %v989 = vpop.xlane.xlu0 %988
    %v990 = vsub.f32 %v982, %v986
    %v991 = vsub.f32 %v983, %v989
    %v992 = vmul.f32 %v990, 1.442695
    %v993 = vpow.pop %v992
    %v994 = vmul.f32 %v991, 1.442695
    %v995 = vpow.pop %v994
    %v996 = vsel %vm166, %v993, 0.0
    %997 = vadd.xlane.f32.xlu0 %v996
    %v998 = vpop.xlane.xlu0 %997
    %v999 = vsel %vm166, %v995, 0.0
    %1000 = vadd.xlane.f32.xlu0 %v999
    %v1001 = vpop.xlane.xlu0 %1000
    %v1002 = vrcp.pop %v998
    %v1003 = vmul.f32 %v993, %v1002
    %v1004 = vrcp.pop %v1001
    %v1005 = vmul.f32 %v995, %v1004
    %1006 = vrot.lane.b32.xlu0 %v155, 48
    %v1007 = vpop.permute.xlu0 %1006
    %v1010 = vsel %vm166, %v1003, 0
    %1012 = vmatprep.subr.mxu0 0.0
    %1013 = vmatpush1.msra.mxu0 %v1007
    %1014 = vmatprep.subr.mxu0 0.0
    %1015 = vmatpush1.msra.mxu0 0.0
    %1016 = vmatprep.subr.mxu0 0.0
    %1017 = vmatpush1.msra.mxu0 0.0
    %1018 = vmatprep.subr.mxu0 0.0
    %1019 = vmatpush1.msra.mxu0 0.0
    %1020 = vmatprep.subr.mxu0 0.0
    %1021 = vmatpush1.msra.mxu0 0.0
    %1022 = vmatprep.subr.mxu0 0.0
    %1023 = vmatpush1.msra.mxu0 0.0
    %1024 = vmatprep.subr.mxu0 0.0
    %1025 = vmatpush1.msra.mxu0 0.0
    %1026 = vmatprep.subr.mxu0 0.0
    %1027 = vmatpush1.msra.mxu0 0.0
    %1028 = vmatprep.subr.mxu0 0.0
    %1029 = vmatpush1.msra.mxu0 0.0
    %1030 = vmatprep.subr.mxu0 0.0
    %1031 = vmatpush1.msra.mxu0 0.0
    %1032 = vmatprep.subr.mxu0 0.0
    %1033 = vmatpush1.msra.mxu0 0.0
    %1034 = vmatprep.subr.mxu0 0.0
    %1035 = vmatpush1.msra.mxu0 0.0
    %1036 = vmatprep.subr.mxu0 0.0
    %1037 = vmatpush1.msra.mxu0 0.0
    %1038 = vmatprep.subr.mxu0 0.0
    %1039 = vmatpush1.msra.mxu0 0.0
    %1040 = vmatprep.subr.mxu0 0.0
    %1041 = vmatpush1.msra.mxu0 0.0
    %1042 = vmatprep.subr.mxu0 0.0
    %1043 = vmatpush1.msra.mxu0 0.0
    %1044 = vmatprep.subr.mxu0 0.0
    %1045 = vmatpush1.msra.mxu0 0.0
    %1046 = vmatprep.subr.mxu0 0.0
    %1047 = vmatpush1.msra.mxu0 0.0
    %1048 = vmatprep.subr.mxu0 0.0
    %1049 = vmatpush1.msra.mxu0 0.0
    %1050 = vmatprep.subr.mxu0 0.0
    %1051 = vmatpush1.msra.mxu0 0.0
    %1052 = vmatprep.subr.mxu0 0.0
    %1053 = vmatpush1.msra.mxu0 0.0
    %1054 = vmatprep.subr.mxu0 0.0
    %1055 = vmatpush1.msra.mxu0 0.0
    %1056 = vmatprep.subr.mxu0 0.0
    %1057 = vmatpush1.msra.mxu0 0.0
    %1058 = vmatprep.subr.mxu0 0.0
    %1059 = vmatpush1.msra.mxu0 0.0
    %1060 = vmatprep.subr.mxu0 0.0
    %1061 = vmatpush1.msra.mxu0 0.0
    %1062 = vmatprep.subr.mxu0 0.0
    %1063 = vmatpush1.msra.mxu0 0.0
    %1064 = vmatprep.subr.mxu0 0.0
    %1065 = vmatpush1.msra.mxu0 0.0
    %1066 = vmatprep.subr.mxu0 0.0
    %1067 = vmatpush1.msra.mxu0 0.0
    %1068 = vmatprep.subr.mxu0 0.0
    %1069 = vmatpush1.msra.mxu0 0.0
    %1070 = vmatprep.subr.mxu0 0.0
    %1071 = vmatpush1.msra.mxu0 0.0
    %1072 = vmatprep.subr.mxu0 0.0
    %1073 = vmatpush1.msra.mxu0 0.0
    %1074 = vmatprep.subr.mxu0 0.0
    %1075 = vmatpush1.msra.mxu0 0.0
    %1076 = vmatprep.mubr.f32.mxu0 0.0
    %1077 = vmatmul.mubr.f32.gmra.mrb[0].mxu0 %v1010
    %v1078 = vpop.f32.mrb[0].mxu0
    %v1079 = vadd.f32 0.0, %v1078
    %v1080 = vpop.f32.mrb[0].mxu0
    %1081 = vdwg.mxu0
    %1082 = vrot.lane.b32.xlu0 %v160, 48
    %v1083 = vpop.permute.xlu0 %1082
    %v1086 = vsel %vm166, %v1005, 0
    %1088 = vmatprep.subr.mxu0 0.0
    %1089 = vmatpush1.msra.mxu0 %v1083
    %1090 = vmatprep.subr.mxu0 0.0
    %1091 = vmatpush1.msra.mxu0 0.0
    %1092 = vmatprep.subr.mxu0 0.0
    %1093 = vmatpush1.msra.mxu0 0.0
    %1094 = vmatprep.subr.mxu0 0.0
    %1095 = vmatpush1.msra.mxu0 0.0
    %1096 = vmatprep.subr.mxu0 0.0
    %1097 = vmatpush1.msra.mxu0 0.0
    %1098 = vmatprep.subr.mxu0 0.0
    %1099 = vmatpush1.msra.mxu0 0.0
    %1100 = vmatprep.subr.mxu0 0.0
    %1101 = vmatpush1.msra.mxu0 0.0
    %1102 = vmatprep.subr.mxu0 0.0
    %1103 = vmatpush1.msra.mxu0 0.0
    %1104 = vmatprep.subr.mxu0 0.0
    %1105 = vmatpush1.msra.mxu0 0.0
    %1106 = vmatprep.subr.mxu0 0.0
    %1107 = vmatpush1.msra.mxu0 0.0
    %1108 = vmatprep.subr.mxu0 0.0
    %1109 = vmatpush1.msra.mxu0 0.0
    %1110 = vmatprep.subr.mxu0 0.0
    %1111 = vmatpush1.msra.mxu0 0.0
    %1112 = vmatprep.subr.mxu0 0.0
    %1113 = vmatpush1.msra.mxu0 0.0
    %1114 = vmatprep.subr.mxu0 0.0
    %1115 = vmatpush1.msra.mxu0 0.0
    %1116 = vmatprep.subr.mxu0 0.0
    %1117 = vmatpush1.msra.mxu0 0.0
    %1118 = vmatprep.subr.mxu0 0.0
    %1119 = vmatpush1.msra.mxu0 0.0
    %1120 = vmatprep.subr.mxu0 0.0
    %1121 = vmatpush1.msra.mxu0 0.0
    %1122 = vmatprep.subr.mxu0 0.0
    %1123 = vmatpush1.msra.mxu0 0.0
    %1124 = vmatprep.subr.mxu0 0.0
    %1125 = vmatpush1.msra.mxu0 0.0
    %1126 = vmatprep.subr.mxu0 0.0
    %1127 = vmatpush1.msra.mxu0 0.0
    %1128 = vmatprep.subr.mxu0 0.0
    %1129 = vmatpush1.msra.mxu0 0.0
    %1130 = vmatprep.subr.mxu0 0.0
    %1131 = vmatpush1.msra.mxu0 0.0
    %1132 = vmatprep.subr.mxu0 0.0
    %1133 = vmatpush1.msra.mxu0 0.0
    %1134 = vmatprep.subr.mxu0 0.0
    %1135 = vmatpush1.msra.mxu0 0.0
    %1136 = vmatprep.subr.mxu0 0.0
    %1137 = vmatpush1.msra.mxu0 0.0
    %1138 = vmatprep.subr.mxu0 0.0
    %1139 = vmatpush1.msra.mxu0 0.0
    %1140 = vmatprep.subr.mxu0 0.0
    %1141 = vmatpush1.msra.mxu0 0.0
    %1142 = vmatprep.subr.mxu0 0.0
    %1143 = vmatpush1.msra.mxu0 0.0
    %1144 = vmatprep.subr.mxu0 0.0
    %1145 = vmatpush1.msra.mxu0 0.0
    %1146 = vmatprep.subr.mxu0 0.0
    %1147 = vmatpush1.msra.mxu0 0.0
    %1148 = vmatprep.subr.mxu0 0.0
    %1149 = vmatpush1.msra.mxu0 0.0
    %1150 = vmatprep.subr.mxu0 0.0
    %1151 = vmatpush1.msra.mxu0 0.0
    %1152 = vmatprep.mubr.f32.mxu0 0.0
    %1153 = vmatmul.mubr.f32.gmra.mrb[0].mxu0 %v1086
    %v1154 = vpop.f32.mrb[0].mxu0
    %v1155 = vadd.f32 0.0, %v1154
    %v1156 = vpop.f32.mrb[0].mxu0
    %1157 = vdwg.mxu0
    %1158 = vrot.lane.b32.xlu0 %v155, 104
    %v1159 = vpop.permute.xlu0 %1158
    %1160 = vrot.lane.b32.xlu0 %v155, 72
    %v1161 = vpop.permute.xlu0 %1160
    %v1162 = vsel %vm166, %v1159, 0
    %v1164 = vsel %vm166, %v1161, 0
    %1166 = vmatprep.subr.mxu0 0.0
    %1167 = vmatpush1.xpose.msra.mxu0 %v1164
    %1168 = vmatprep.subr.mxu0 0.0
    %1169 = vmatpush1.xpose.msra.mxu0 0.0
    %1170 = vmatprep.subr.mxu0 0.0
    %1171 = vmatpush1.xpose.msra.mxu0 0.0
    %1172 = vmatprep.subr.mxu0 0.0
    %1173 = vmatpush1.xpose.msra.mxu0 0.0
    %1174 = vmatprep.subr.mxu0 0.0
    %1175 = vmatpush1.xpose.msra.mxu0 0.0
    %1176 = vmatprep.subr.mxu0 0.0
    %1177 = vmatpush1.xpose.msra.mxu0 0.0
    %1178 = vmatprep.subr.mxu0 0.0
    %1179 = vmatpush1.xpose.msra.mxu0 0.0
    %1180 = vmatprep.subr.mxu0 0.0
    %1181 = vmatpush1.xpose.msra.mxu0 0.0
    %1182 = vmatprep.subr.mxu0 0.0
    %1183 = vmatpush1.xpose.msra.mxu0 0.0
    %1184 = vmatprep.subr.mxu0 0.0
    %1185 = vmatpush1.xpose.msra.mxu0 0.0
    %1186 = vmatprep.subr.mxu0 0.0
    %1187 = vmatpush1.xpose.msra.mxu0 0.0
    %1188 = vmatprep.subr.mxu0 0.0
    %1189 = vmatpush1.xpose.msra.mxu0 0.0
    %1190 = vmatprep.subr.mxu0 0.0
    %1191 = vmatpush1.xpose.msra.mxu0 0.0
    %1192 = vmatprep.subr.mxu0 0.0
    %1193 = vmatpush1.xpose.msra.mxu0 0.0
    %1194 = vmatprep.subr.mxu0 0.0
    %1195 = vmatpush1.xpose.msra.mxu0 0.0
    %1196 = vmatprep.subr.mxu0 0.0
    %1197 = vmatpush1.xpose.msra.mxu0 0.0
    %1198 = vmatprep.subr.mxu0 0.0
    %1199 = vmatpush1.xpose.msra.mxu0 0.0
    %1200 = vmatprep.subr.mxu0 0.0
    %1201 = vmatpush1.xpose.msra.mxu0 0.0
    %1202 = vmatprep.subr.mxu0 0.0
    %1203 = vmatpush1.xpose.msra.mxu0 0.0
    %1204 = vmatprep.subr.mxu0 0.0
    %1205 = vmatpush1.xpose.msra.mxu0 0.0
    %1206 = vmatprep.subr.mxu0 0.0
    %1207 = vmatpush1.xpose.msra.mxu0 0.0
    %1208 = vmatprep.subr.mxu0 0.0
    %1209 = vmatpush1.xpose.msra.mxu0 0.0
    %1210 = vmatprep.subr.mxu0 0.0
    %1211 = vmatpush1.xpose.msra.mxu0 0.0
    %1212 = vmatprep.subr.mxu0 0.0
    %1213 = vmatpush1.xpose.msra.mxu0 0.0
    %1214 = vmatprep.subr.mxu0 0.0
    %1215 = vmatpush1.xpose.msra.mxu0 0.0
    %1216 = vmatprep.subr.mxu0 0.0
    %1217 = vmatpush1.xpose.msra.mxu0 0.0
    %1218 = vmatprep.subr.mxu0 0.0
    %1219 = vmatpush1.xpose.msra.mxu0 0.0
    %1220 = vmatprep.subr.mxu0 0.0
    %1221 = vmatpush1.xpose.msra.mxu0 0.0
    %1222 = vmatprep.subr.mxu0 0.0
    %1223 = vmatpush1.xpose.msra.mxu0 0.0
    %1224 = vmatprep.subr.mxu0 0.0
    %1225 = vmatpush1.xpose.msra.mxu0 0.0
    %1226 = vmatprep.subr.mxu0 0.0
    %1227 = vmatpush1.xpose.msra.mxu0 0.0
    %1228 = vmatprep.subr.mxu0 0.0
    %1229 = vmatpush1.xpose.msra.mxu0 0.0
    %1230 = vmatprep.mubr.f32.mxu0 0.0
    %1231 = vmatmul.mubr.f32.gmra.mrb[0].mxu0 %v1162
    %v1232 = vpop.f32.mrb[0].mxu0
    %v1233 = vadd.f32 0.0, %v1232
    %v1234 = vpop.f32.mrb[0].mxu0
    %1235 = vdwg.mxu0
    %1236 = vrot.lane.b32.xlu0 %v160, 104
    %v1237 = vpop.permute.xlu0 %1236
    %1238 = vrot.lane.b32.xlu0 %v160, 72
    %v1239 = vpop.permute.xlu0 %1238
    %v1240 = vsel %vm166, %v1237, 0
    %v1242 = vsel %vm166, %v1239, 0
    %1244 = vmatprep.subr.mxu0 0.0
    %1245 = vmatpush1.xpose.msra.mxu0 %v1242
    %1246 = vmatprep.subr.mxu0 0.0
    %1247 = vmatpush1.xpose.msra.mxu0 0.0
    %1248 = vmatprep.subr.mxu0 0.0
    %1249 = vmatpush1.xpose.msra.mxu0 0.0
    %1250 = vmatprep.subr.mxu0 0.0
    %1251 = vmatpush1.xpose.msra.mxu0 0.0
    %1252 = vmatprep.subr.mxu0 0.0
    %1253 = vmatpush1.xpose.msra.mxu0 0.0
    %1254 = vmatprep.subr.mxu0 0.0
    %1255 = vmatpush1.xpose.msra.mxu0 0.0
    %1256 = vmatprep.subr.mxu0 0.0
    %1257 = vmatpush1.xpose.msra.mxu0 0.0
    %1258 = vmatprep.subr.mxu0 0.0
    %1259 = vmatpush1.xpose.msra.mxu0 0.0
    %1260 = vmatprep.subr.mxu0 0.0
    %1261 = vmatpush1.xpose.msra.mxu0 0.0
    %1262 = vmatprep.subr.mxu0 0.0
    %1263 = vmatpush1.xpose.msra.mxu0 0.0
    %1264 = vmatprep.subr.mxu0 0.0
    %1265 = vmatpush1.xpose.msra.mxu0 0.0
    %1266 = vmatprep.subr.mxu0 0.0
    %1267 = vmatpush1.xpose.msra.mxu0 0.0
    %1268 = vmatprep.subr.mxu0 0.0
    %1269 = vmatpush1.xpose.msra.mxu0 0.0
    %1270 = vmatprep.subr.mxu0 0.0
    %1271 = vmatpush1.xpose.msra.mxu0 0.0
    %1272 = vmatprep.subr.mxu0 0.0
    %1273 = vmatpush1.xpose.msra.mxu0 0.0
    %1274 = vmatprep.subr.mxu0 0.0
    %1275 = vmatpush1.xpose.msra.mxu0 0.0
    %1276 = vmatprep.subr.mxu0 0.0
    %1277 = vmatpush1.xpose.msra.mxu0 0.0
    %1278 = vmatprep.subr.mxu0 0.0
    %1279 = vmatpush1.xpose.msra.mxu0 0.0
    %1280 = vmatprep.subr.mxu0 0.0
    %1281 = vmatpush1.xpose.msra.mxu0 0.0
    %1282 = vmatprep.subr.mxu0 0.0
    %1283 = vmatpush1.xpose.msra.mxu0 0.0
    %1284 = vmatprep.subr.mxu0 0.0
    %1285 = vmatpush1.xpose.msra.mxu0 0.0
    %1286 = vmatprep.subr.mxu0 0.0
    %1287 = vmatpush1.xpose.msra.mxu0 0.0
    %1288 = vmatprep.subr.mxu0 0.0
    %1289 = vmatpush1.xpose.msra.mxu0 0.0
    %1290 = vmatprep.subr.mxu0 0.0
    %1291 = vmatpush1.xpose.msra.mxu0 0.0
    %1292 = vmatprep.subr.mxu0 0.0
    %1293 = vmatpush1.xpose.msra.mxu0 0.0
    %1294 = vmatprep.subr.mxu0 0.0
    %1295 = vmatpush1.xpose.msra.mxu0 0.0
    %1296 = vmatprep.subr.mxu0 0.0
    %1297 = vmatpush1.xpose.msra.mxu0 0.0
    %1298 = vmatprep.subr.mxu0 0.0
    %1299 = vmatpush1.xpose.msra.mxu0 0.0
    %1300 = vmatprep.subr.mxu0 0.0
    %1301 = vmatpush1.xpose.msra.mxu0 0.0
    %1302 = vmatprep.subr.mxu0 0.0
    %1303 = vmatpush1.xpose.msra.mxu0 0.0
    %1304 = vmatprep.subr.mxu0 0.0
    %1305 = vmatpush1.xpose.msra.mxu0 0.0
    %1306 = vmatprep.subr.mxu0 0.0
    %1307 = vmatpush1.xpose.msra.mxu0 0.0
    %1308 = vmatprep.mubr.f32.mxu0 0.0
    %1309 = vmatmul.mubr.f32.gmra.mrb[0].mxu0 %v1240
    %v1310 = vpop.f32.mrb[0].mxu0
    %v1311 = vadd.f32 0.0, %v1310
    %v1312 = vpop.f32.mrb[0].mxu0
    %1313 = vdwg.mxu0
    %v1314 = vmul.f32 %v1233, 0.35355338
    %v1315 = vmul.f32 %v1311, 0.35355338
    %v1316 = vsel %vm166, %v1314, -inf
    %1317 = vmax.xlane.f32.xlu0 %v1316
    %v1318 = vpop.xlane.xlu0 %1317
    %v1319 = vsel %vm166, %v1315, -inf
    %1320 = vmax.xlane.f32.xlu0 %v1319
    %v1321 = vpop.xlane.xlu0 %1320
    %v1322 = vsub.f32 %v1314, %v1318
    %v1323 = vsub.f32 %v1315, %v1321
    %v1324 = vmul.f32 %v1322, 1.442695
    %v1325 = vpow.pop %v1324
    %v1326 = vmul.f32 %v1323, 1.442695
    %v1327 = vpow.pop %v1326
    %v1328 = vsel %vm166, %v1325, 0.0
    %1329 = vadd.xlane.f32.xlu0 %v1328
    %v1330 = vpop.xlane.xlu0 %1329
    %v1331 = vsel %vm166, %v1327, 0.0
    %1332 = vadd.xlane.f32.xlu0 %v1331
    %v1333 = vpop.xlane.xlu0 %1332
    %v1334 = vrcp.pop %v1330
    %v1335 = vmul.f32 %v1325, %v1334
    %v1336 = vrcp.pop %v1333
    %v1337 = vmul.f32 %v1327, %v1336
    %1338 = vrot.lane.b32.xlu0 %v155, 40
    %v1339 = vpop.permute.xlu0 %1338
    %v1342 = vsel %vm166, %v1335, 0
    %1344 = vmatprep.subr.mxu0 0.0
    %1345 = vmatpush1.msra.mxu0 %v1339
    %1346 = vmatprep.subr.mxu0 0.0
    %1347 = vmatpush1.msra.mxu0 0.0
    %1348 = vmatprep.subr.mxu0 0.0
    %1349 = vmatpush1.msra.mxu0 0.0
    %1350 = vmatprep.subr.mxu0 0.0
    %1351 = vmatpush1.msra.mxu0 0.0
    %1352 = vmatprep.subr.mxu0 0.0
    %1353 = vmatpush1.msra.mxu0 0.0
    %1354 = vmatprep.subr.mxu0 0.0
    %1355 = vmatpush1.msra.mxu0 0.0
    %1356 = vmatprep.subr.mxu0 0.0
    %1357 = vmatpush1.msra.mxu0 0.0
    %1358 = vmatprep.subr.mxu0 0.0
    %1359 = vmatpush1.msra.mxu0 0.0
    %1360 = vmatprep.subr.mxu0 0.0
    %1361 = vmatpush1.msra.mxu0 0.0
    %1362 = vmatprep.subr.mxu0 0.0
    %1363 = vmatpush1.msra.mxu0 0.0
    %1364 = vmatprep.subr.mxu0 0.0
    %1365 = vmatpush1.msra.mxu0 0.0
    %1366 = vmatprep.subr.mxu0 0.0
    %1367 = vmatpush1.msra.mxu0 0.0
    %1368 = vmatprep.subr.mxu0 0.0
    %1369 = vmatpush1.msra.mxu0 0.0
    %1370 = vmatprep.subr.mxu0 0.0
    %1371 = vmatpush1.msra.mxu0 0.0
    %1372 = vmatprep.subr.mxu0 0.0
    %1373 = vmatpush1.msra.mxu0 0.0
    %1374 = vmatprep.subr.mxu0 0.0
    %1375 = vmatpush1.msra.mxu0 0.0
    %1376 = vmatprep.subr.mxu0 0.0
    %1377 = vmatpush1.msra.mxu0 0.0
    %1378 = vmatprep.subr.mxu0 0.0
    %1379 = vmatpush1.msra.mxu0 0.0
    %1380 = vmatprep.subr.mxu0 0.0
    %1381 = vmatpush1.msra.mxu0 0.0
    %1382 = vmatprep.subr.mxu0 0.0
    %1383 = vmatpush1.msra.mxu0 0.0
    %1384 = vmatprep.subr.mxu0 0.0
    %1385 = vmatpush1.msra.mxu0 0.0
    %1386 = vmatprep.subr.mxu0 0.0
    %1387 = vmatpush1.msra.mxu0 0.0
    %1388 = vmatprep.subr.mxu0 0.0
    %1389 = vmatpush1.msra.mxu0 0.0
    %1390 = vmatprep.subr.mxu0 0.0
    %1391 = vmatpush1.msra.mxu0 0.0
    %1392 = vmatprep.subr.mxu0 0.0
    %1393 = vmatpush1.msra.mxu0 0.0
    %1394 = vmatprep.subr.mxu0 0.0
    %1395 = vmatpush1.msra.mxu0 0.0
    %1396 = vmatprep.subr.mxu0 0.0
    %1397 = vmatpush1.msra.mxu0 0.0
    %1398 = vmatprep.subr.mxu0 0.0
    %1399 = vmatpush1.msra.mxu0 0.0
    %1400 = vmatprep.subr.mxu0 0.0
    %1401 = vmatpush1.msra.mxu0 0.0
    %1402 = vmatprep.subr.mxu0 0.0
    %1403 = vmatpush1.msra.mxu0 0.0
    %1404 = vmatprep.subr.mxu0 0.0
    %1405 = vmatpush1.msra.mxu0 0.0
    %1406 = vmatprep.subr.mxu0 0.0
    %1407 = vmatpush1.msra.mxu0 0.0
    %1408 = vmatprep.mubr.f32.mxu0 0.0
    %1409 = vmatmul.mubr.f32.gmra.mrb[0].mxu0 %v1342
    %v1410 = vpop.f32.mrb[0].mxu0
    %v1411 = vadd.f32 0.0, %v1410
    %v1412 = vpop.f32.mrb[0].mxu0
    %1413 = vdwg.mxu0
    %1414 = vrot.lane.b32.xlu0 %v160, 40
    %v1415 = vpop.permute.xlu0 %1414
    %v1418 = vsel %vm166, %v1337, 0
    %1420 = vmatprep.subr.mxu0 0.0
    %1421 = vmatpush1.msra.mxu0 %v1415
    %1422 = vmatprep.subr.mxu0 0.0
    %1423 = vmatpush1.msra.mxu0 0.0
    %1424 = vmatprep.subr.mxu0 0.0
    %1425 = vmatpush1.msra.mxu0 0.0
    %1426 = vmatprep.subr.mxu0 0.0
    %1427 = vmatpush1.msra.mxu0 0.0
    %1428 = vmatprep.subr.mxu0 0.0
    %1429 = vmatpush1.msra.mxu0 0.0
    %1430 = vmatprep.subr.mxu0 0.0
    %1431 = vmatpush1.msra.mxu0 0.0
    %1432 = vmatprep.subr.mxu0 0.0
    %1433 = vmatpush1.msra.mxu0 0.0
    %1434 = vmatprep.subr.mxu0 0.0
    %1435 = vmatpush1.msra.mxu0 0.0
    %1436 = vmatprep.subr.mxu0 0.0
    %1437 = vmatpush1.msra.mxu0 0.0
    %1438 = vmatprep.subr.mxu0 0.0
    %1439 = vmatpush1.msra.mxu0 0.0
    %1440 = vmatprep.subr.mxu0 0.0
    %1441 = vmatpush1.msra.mxu0 0.0
    %1442 = vmatprep.subr.mxu0 0.0
    %1443 = vmatpush1.msra.mxu0 0.0
    %1444 = vmatprep.subr.mxu0 0.0
    %1445 = vmatpush1.msra.mxu0 0.0
    %1446 = vmatprep.subr.mxu0 0.0
    %1447 = vmatpush1.msra.mxu0 0.0
    %1448 = vmatprep.subr.mxu0 0.0
    %1449 = vmatpush1.msra.mxu0 0.0
    %1450 = vmatprep.subr.mxu0 0.0
    %1451 = vmatpush1.msra.mxu0 0.0
    %1452 = vmatprep.subr.mxu0 0.0
    %1453 = vmatpush1.msra.mxu0 0.0
    %1454 = vmatprep.subr.mxu0 0.0
    %1455 = vmatpush1.msra.mxu0 0.0
    %1456 = vmatprep.subr.mxu0 0.0
    %1457 = vmatpush1.msra.mxu0 0.0
    %1458 = vmatprep.subr.mxu0 0.0
    %1459 = vmatpush1.msra.mxu0 0.0
    %1460 = vmatprep.subr.mxu0 0.0
    %1461 = vmatpush1.msra.mxu0 0.0
    %1462 = vmatprep.subr.mxu0 0.0
    %1463 = vmatpush1.msra.mxu0 0.0
    %1464 = vmatprep.subr.mxu0 0.0
    %1465 = vmatpush1.msra.mxu0 0.0
    %1466 = vmatprep.subr.mxu0 0.0
    %1467 = vmatpush1.msra.mxu0 0.0
    %1468 = vmatprep.subr.mxu0 0.0
    %1469 = vmatpush1.msra.mxu0 0.0
    %1470 = vmatprep.subr.mxu0 0.0
    %1471 = vmatpush1.msra.mxu0 0.0
    %1472 = vmatprep.subr.mxu0 0.0
    %1473 = vmatpush1.msra.mxu0 0.0
    %1474 = vmatprep.subr.mxu0 0.0
    %1475 = vmatpush1.msra.mxu0 0.0
    %1476 = vmatprep.subr.mxu0 0.0
    %1477 = vmatpush1.msra.mxu0 0.0
    %1478 = vmatprep.subr.mxu0 0.0
    %1479 = vmatpush1.msra.mxu0 0.0
    %1480 = vmatprep.subr.mxu0 0.0
    %1481 = vmatpush1.msra.mxu0 0.0
    %1482 = vmatprep.subr.mxu0 0.0
    %1483 = vmatpush1.msra.mxu0 0.0
    %1484 = vmatprep.mubr.f32.mxu0 0.0
    %1485 = vmatmul.mubr.f32.gmra.mrb[0].mxu0 %v1418
    %v1486 = vpop.f32.mrb[0].mxu0
    %v1487 = vadd.f32 0.0, %v1486
    %v1488 = vpop.f32.mrb[0].mxu0
    %1489 = vdwg.mxu0
    %1492 = vrot.lane.b32.xlu0 %v747, 8
    %v1493 = vpop.permute.xlu0 %1492
    %1494 = vrot.lane.b32.xlu0 %v823, 8
    %v1495 = vpop.permute.xlu0 %1494
    %1500 = vrot.lane.b32.xlu0 %v1079, 16
    %v1501 = vpop.permute.xlu0 %1500
    %1502 = vrot.lane.b32.xlu0 %v1155, 16
    %v1503 = vpop.permute.xlu0 %1502
    %1508 = vrot.lane.b32.xlu0 %v1411, 24
    %v1509 = vpop.permute.xlu0 %1508
    %1510 = vrot.lane.b32.xlu0 %v1487, 24
    %v1511 = vpop.permute.xlu0 %1510
    %v1514 = vsel %vm166, %v415, %v1493
    %v1515 = vsel %vm166, %v491, %v1495
    %vm1516 = vcmask 130048
    %v1517 = vsel %vm1516, %v1514, %v1501
    %v1518 = vsel %vm1516, %v1515, %v1503
    %vm1519 = vcmask 195584
    %v1520 = vsel %vm1519, %v1517, %v1509
    %v1521 = vsel %vm1519, %v1518, %v1511
    %v1522 = vld [vmem:[#allocation7] sm:$0xff]
    %v1523 = vld [vmem:[#allocation7 + $0x8] sm:$0xff]
    %v1524 = vld [vmem:[#allocation7 + $0x10] sm:$0xff]
    %v1525 = vld [vmem:[#allocation7 + $0x18] sm:$0xff]
    %v1527 = vsel %vm81, %v1520, 0
    %v1530 = vsel %vm81, %v1521, 0
    %1532 = vmatprep.subr.mxu0 0.0
    %1533 = vmatpush1.msra.mxu0 %v1522
    %1534 = vmatprep.subr.mxu0 0.0
    %1535 = vmatpush1.msra.mxu0 %v1523
    %1536 = vmatprep.subr.mxu0 0.0
    %1537 = vmatpush1.msra.mxu0 %v1524
    %1538 = vmatprep.subr.mxu0 0.0
    %1539 = vmatpush1.msra.mxu0 %v1525
    %1540 = vmatprep.subr.mxu0 0.0
    %1541 = vmatpush1.msra.mxu0 0.0
    %1542 = vmatprep.subr.mxu0 0.0
    %1543 = vmatpush1.msra.mxu0 0.0
    %1544 = vmatprep.subr.mxu0 0.0
    %1545 = vmatpush1.msra.mxu0 0.0
    %1546 = vmatprep.subr.mxu0 0.0
    %1547 = vmatpush1.msra.mxu0 0.0
    %1548 = vmatprep.subr.mxu0 0.0
    %1549 = vmatpush1.msra.mxu0 0.0
    %1550 = vmatprep.subr.mxu0 0.0
    %1551 = vmatpush1.msra.mxu0 0.0
    %1552 = vmatprep.subr.mxu0 0.0
    %1553 = vmatpush1.msra.mxu0 0.0
    %1554 = vmatprep.subr.mxu0 0.0
    %1555 = vmatpush1.msra.mxu0 0.0
    %1556 = vmatprep.subr.mxu0 0.0
    %1557 = vmatpush1.msra.mxu0 0.0
    %1558 = vmatprep.subr.mxu0 0.0
    %1559 = vmatpush1.msra.mxu0 0.0
    %1560 = vmatprep.subr.mxu0 0.0
    %1561 = vmatpush1.msra.mxu0 0.0
    %1562 = vmatprep.subr.mxu0 0.0
    %1563 = vmatpush1.msra.mxu0 0.0
    %1564 = vmatprep.subr.mxu0 0.0
    %1565 = vmatpush1.msra.mxu0 0.0
    %1566 = vmatprep.subr.mxu0 0.0
    %1567 = vmatpush1.msra.mxu0 0.0
    %1568 = vmatprep.subr.mxu0 0.0
    %1569 = vmatpush1.msra.mxu0 0.0
    %1570 = vmatprep.subr.mxu0 0.0
    %1571 = vmatpush1.msra.mxu0 0.0
    %1572 = vmatprep.subr.mxu0 0.0
    %1573 = vmatpush1.msra.mxu0 0.0
    %1574 = vmatprep.subr.mxu0 0.0
    %1575 = vmatpush1.msra.mxu0 0.0
    %1576 = vmatprep.subr.mxu0 0.0
    %1577 = vmatpush1.msra.mxu0 0.0
    %1578 = vmatprep.subr.mxu0 0.0
    %1579 = vmatpush1.msra.mxu0 0.0
    %1580 = vmatprep.subr.mxu0 0.0
    %1581 = vmatpush1.msra.mxu0 0.0
    %1582 = vmatprep.subr.mxu0 0.0
    %1583 = vmatpush1.msra.mxu0 0.0
    %1584 = vmatprep.subr.mxu0 0.0
    %1585 = vmatpush1.msra.mxu0 0.0
    %1586 = vmatprep.subr.mxu0 0.0
    %1587 = vmatpush1.msra.mxu0 0.0
    %1588 = vmatprep.subr.mxu0 0.0
    %1589 = vmatpush1.msra.mxu0 0.0
    %1590 = vmatprep.subr.mxu0 0.0
    %1591 = vmatpush1.msra.mxu0 0.0
    %1592 = vmatprep.subr.mxu0 0.0
    %1593 = vmatpush1.msra.mxu0 0.0
    %1594 = vmatprep.subr.mxu0 0.0
    %1595 = vmatpush1.msra.mxu0 0.0
    %1596 = vmatprep.mubr.f32.mxu0 0.0
    %1597 = vmatmul.mubr.f32.gmra.mrb[0].mxu0 %v1527
    %v1598 = vpop.f32.mrb[0].mxu0
    %v1599 = vadd.f32 0.0, %v1598
    %v1600 = vpop.f32.mrb[0].mxu0
    %1601 = vmatprep.mubr.f32.mxu0 0.0
    %1602 = vmatmul.mubr.f32.gmra.mrb[0].mxu0 %v1530
    %v1603 = vpop.f32.mrb[0].mxu0
    %v1604 = vadd.f32 0.0, %v1603
    %v1605 = vpop.f32.mrb[0].mxu0
    %1606 = vdwg.mxu0
    %v1607 = vadd.f32 %v68, %v1599
    %v1608 = vadd.f32 %v69, %v1604
    %v1609 = vld [vmem:[%s4] sm:$0x1]
    %v1611 = vlaneseq
    %v1612 = vshrl.u32 %v1611, 7
    %v1613 = vsub.s32 0, %v1612
    %v1614 = vrot.slane %v1609, %v1613
    %v1616 = vadd.f32 %v1607, %v1614
    %v1617 = vadd.f32 %v1608, %v1614
    %v1618 = vsel %vm81, %v1616, 0.0
    %v1619 = vsel %vm81, %v1617, 0.0
    %v1620 = vadd.f32 %v1618, %v1619
    %v1621 = vrot.slane %v1620, 4
    %v1622 = vadd.f32 %v1620, %v1621
    %v1623 = vrot.slane %v1622, 2
    %v1624 = vadd.f32 %v1622, %v1623
    %v1625 = vrot.slane %v1624, 1
    %v1626 = vadd.f32 %v1624, %v1625
    %v1627 = vmul.f32 %v1626, 0.0625
    %v1628 = vsub.f32 %v1616, %v1627
    %v1629 = vsub.f32 %v1617, %v1627
    %v1630 = vmul.f32 %v1628, %v1628
    %v1631 = vmul.f32 %v1629, %v1629
    %v1632 = vsel %vm81, %v1630, 0.0
    %v1633 = vsel %vm81, %v1631, 0.0
    %v1634 = vadd.f32 %v1632, %v1633
    %v1635 = vrot.slane %v1634, 4
    %v1636 = vadd.f32 %v1634, %v1635
    %v1637 = vrot.slane %v1636, 2
    %v1638 = vadd.f32 %v1636, %v1637
    %v1639 = vrot.slane %v1638, 1
    %v1640 = vadd.f32 %v1638, %v1639
    %v1641 = vmul.f32 %v1640, 0.0625
    %v1642 = vadd.f32 %v1641, 1e-05
    %v1643 = vrsqrt.pop %v1642
    %v1644 = vmul.f32 %v1628, %v1643
    %v1645 = vmul.f32 %v1629, %v1643
    %v1646 = vld [vmem:[%s5] sm:$0x1]
    %v1648 = vlaneseq
    %v1649 = vshrl.u32 %v1648, 7
    %v1650 = vsub.s32 0, %v1649
    %v1651 = vrot.slane %v1646, %v1650
    %v1653 = vmul.f32 %v1644, %v1651
    %v1654 = vmul.f32 %v1645, %v1651
    %v1655 = vld [vmem:[%s6] sm:$0x1]
    %v1657 = vlaneseq
    %v1658 = vshrl.u32 %v1657, 7
    %v1659 = vsub.s32 0, %v1658
    %v1660 = vrot.slane %v1655, %v1659
    %v1662 = vadd.f32 %v1653, %v1660
    %v1663 = vadd.f32 %v1654, %v1660
    %1664 = vst.msk [vmem:[#allocation8] sm:$0xff] %vm81, %v1662
    %1665 = vst.msk [vmem:[#allocation8 + $0x8] sm:$0xff] %vm81, %v1663
    // Predicated region
    $region42: #{tpu_custom_call.1} parent=1 // pred_check
      _
    $region43: #{tpu_custom_call.1} parent=1 // pred_check_branch
      %1667 = sbr.rel (0) target = $region45
    $region44: #{tpu_custom_call.1} parent=1 // pred_region
      %s1669 = ssub.s32 256, 256
      %1670 = vsyncadd [#allocation4], %s1669
      %s1671 = sshll.u32 [#allocation8], 4
      %s1672 = int_to_ptr.vmem [resolvable:$true] %s1671
      %1677 = dma.vmem_to_hbm [thread:$0]  %s1672, 256, %s7, [#allocation4], 128, 128, 8
    $region45: #{tpu_custom_call.1} parent=1 // pred_fallthru
      _
    // Predicated region
    $region46: #{tpu_custom_call.1} parent=1 // pred_check
      _
    $region47: #{tpu_custom_call.1} parent=1 // pred_check_branch
      %1679 = sbr.rel (0) target = $region49
    $region48: #{tpu_custom_call.1} parent=1 // pred_region
      %1680 = dma.done [#allocation4], 256
    $region49: #{tpu_custom_call.1} parent=1 // pred_fallthru
      _
    %1681 = vsyncpa [#allocation3], 1
    %1682 = vsyncpa [#allocation6], 1
    %1683 = vsyncpa [#allocation4], 1

</llo_original>
